<compile_context>
chip_gen: v6e
topology: v6e:2x2x1
jax: 0.10.0
libtpu: 0.0.40
codegen_flags: <defaults>
</compile_context>

<pallas_src>
import math
import functools

import jax
import jax.numpy as jnp
from jax.experimental import pallas as pl
from jax.experimental.pallas import tpu as pltpu


# ---------------------------------------------------------------- config (opt)
class Opt:
    embed_size = 32
    num_patches = 16            # perfect square -> has_cls_token == False
    sparse_ratio = 0.5
    aggr_ratio = 0.5
    attention_weight = 1.0      # unused in forward
    ratio_weight = 1.0          # unused in forward
    use_token_selection = 0
    similarity_calc_method = 'attn'
    use_learnable_temp = 0      # temp = 1.0
    use_cls_as_glob_embd = 0


def is_sqr(n):
    a = int(math.sqrt(n))
    return a * a == n


def _l2norm(x, axis=-1, eps=1e-12):
    return x * jax.lax.rsqrt(
        jnp.maximum(jnp.sum(x * x, axis=axis, keepdims=True), eps * eps))


def _erf(x):
    # Abramowitz & Stegun 7.1.26 erf polynomial (|err| < 1.5e-7); Mosaic-safe ops only.
    p = 0.3275911
    a1, a2, a3, a4, a5 = 0.254829592, -0.284496736, 1.421413741, -1.453152027, 1.061405429
    s = jnp.where(x >= 0, 1.0, -1.0)
    ax = jnp.abs(x)
    t = 1.0 / (1.0 + p * ax)
    poly = ((((a5 * t + a4) * t + a3) * t + a2) * t + a1) * t
    return s * (1.0 - poly * jnp.exp(-ax * ax))


# ---------------------------------------------------------------- fused Pallas kernel
def _fused_caption_kernel(img_ref, cap_ref, keep_ref, dropw_ref,
                          lens_ref, invl_ref, sc_ref,
                          lng_ref, lnb_ref, w1_ref, b1_ref, w2_ref, b2_ref,
                          wi_ref, bi_ref, wt_ref, bt_ref,
                          o_ref, *, tn, cb):
    Bv, L, C = img_ref.shape
    W = cap_ref.shape[1]
    K = keep_ref.shape[2]
    Pp = w2_ref.shape[1]              # padded token slots per image (multiple of 8)
    BT = Bv * Pp                      # flattened (image, token-slot) lane axis
    out_lanes = o_ref.shape[2]

    scale = sc_ref[0]                 # TokenAggregation.scale
    inv_temp = sc_ref[1]              # 1 / temp

    def caption_body(c, carry):
        ci = pl.program_id(0) * cb + c
        wlen = lens_ref[ci]           # real word count of this caption
        inv_wlen = invl_ref[ci]

        img = img_ref[...]            # (Bv, L, C) raw image tokens (resident)
        cap = cap_ref[c]              # (W, C) normalized caption tokens (padded words)
        keep = keep_ref[c]            # (Bv, K) int32 kept-token indices
        dropw = dropw_ref[c]          # (Bv, L)  softmax weights over dropped tokens

        # ---------- caption-side work (hoisted: once per caption, not per image) ------
        cap_i2t = jnp.dot(cap, wi_ref[...], preferred_element_type=jnp.float32) + bi_ref[...]
        cap_t2i = jnp.dot(cap, wt_ref[...], preferred_element_type=jnp.float32) + bt_ref[...]
        cap_stack = jnp.concatenate([cap, cap_i2t, cap_t2i], axis=0)        # (3W, C)
        word_valid = (jax.lax.broadcasted_iota(jnp.int32, (W, 1), 0) < wlen
                      ).astype(jnp.float32)

        # ---------- in-kernel gather of the K selected tokens (one-hot matmul) --------
        onehot = (keep[..., None] ==
                  jax.lax.broadcasted_iota(jnp.int32, (Bv, K, L), 2)).astype(jnp.float32)
        xsel = jnp.einsum('bkl,blc->bkc', onehot, img,
                          preferred_element_type=jnp.float32)               # (Bv, K, C)
        extra = jnp.sum(dropw[:, :, None] * img, axis=1)                    # (Bv, C)

        # ---------- TokenAggregation, batched over ALL images ----------
        xflat = xsel.reshape(Bv * K, C)                                     # tile aligned
        mean = jnp.mean(xflat, axis=-1, keepdims=True)
        var = jnp.mean(jnp.square(xflat - mean), axis=-1, keepdims=True)
        xn = (xflat - mean) * jax.lax.rsqrt(var + 1e-5) * lng_ref[...] + lnb_ref[...]
        h = jnp.dot(xn, w1_ref[...], preferred_element_type=jnp.float32) + b1_ref[...]
        h = 0.5 * h * (1.0 + _erf(h * 0.7071067811865476))                  # exact-erf GELU
        logits = (jnp.dot(h, w2_ref[...], preferred_element_type=jnp.float32)
                  + b2_ref[...]) * scale                                    # (Bv*K, Pp)
        logits3 = logits.reshape(Bv, K, Pp)
        e = jnp.exp(logits3 - jnp.max(logits3, axis=1, keepdims=True))
        sm = e * pl.reciprocal(jnp.sum(e, axis=1, keepdims=True), approx=True)
        aggr = jnp.sum(sm[:, :, :, None] * xsel[:, :, None, :], axis=1)     # (Bv, Pp, C)

        # insert the extra (weighted dropped) token at slot tn-1, then L2 normalize.
        # Relies on the padded w2/b2 columns being exactly zero (they are).
        slot = jax.lax.broadcasted_iota(jnp.int32, (1, Pp, 1), 1)
        tsel = jnp.where(slot == tn - 1, extra[:, None, :], aggr)
        tsel = tsel * jax.lax.rsqrt(
            jnp.maximum(jnp.sum(tsel * tsel, axis=-1, keepdims=True), 1e-24))
        tflat = tsel.reshape(BT, C)                                         # Pp % 8 == 0

        # ---------- similarity: ONE (3W, C) @ (C, Bv*Pp) matmul ----------
        sims = jax.lax.dot_general(cap_stack, tflat, (((1,), (1,)), ((), ())),
                                   preferred_element_type=jnp.float32)      # (3W, BT)
        c2i = sims[:W]
        c2i = jnp.where(c2i >= 0, c2i, 0.1 * c2i)                           # leaky_relu(0.1)
        li2t = sims[W:2 * W] * inv_temp
        lt2i = sims[2 * W:] * inv_temp

        # segment matrix: lane j belongs to image b iff b*Pp <= j < b*Pp + tn
        seg_row = jax.lax.broadcasted_iota(jnp.int32, (BT, out_lanes), 0)
        seg_col = jax.lax.broadcasted_iota(jnp.int32, (BT, out_lanes), 1)
        start = seg_col * Pp
        S = ((seg_row >= start) & (seg_row < start + tn)).astype(jnp.float32)

        # i2t: softmax over caption words (padded words masked out)
        li2t = jnp.where(word_valid > 0, li2t, -1e30)
        ei = jnp.exp(li2t - jnp.max(li2t, axis=0, keepdims=True))
        a_i2t = ei * pl.reciprocal(jnp.sum(ei, axis=0, keepdims=True), approx=True)

        # t2i: per-image softmax over its tn token slots (lane-segmented)
        et = jnp.exp(lt2i - jnp.max(lt2i, axis=1, keepdims=True))
        seg_sum = jax.lax.dot_general(et, S, (((1,), (0,)), ((), ())),
                                      preferred_element_type=jnp.float32)   # (W, out_lanes)
        denom = jax.lax.dot_general(seg_sum, S, (((1,), (1,)), ((), ())),
                                    preferred_element_type=jnp.float32)     # (W, BT)
        a_t2i = jnp.where(
            denom > 0,
            et * pl.reciprocal(jnp.maximum(denom, 1e-30), approx=True), 0.0)

        total = (a_i2t * c2i * (1.0 / tn) + a_t2i * c2i * inv_wlen) * word_valid
        row_total = jnp.sum(total, axis=0, keepdims=True)                   # (1, BT)
        sims_row = jax.lax.dot_general(row_total, S, (((1,), (0,)), ((), ())),
                                       preferred_element_type=jnp.float32)  # (1, out_lanes)
        o_ref[c] = sims_row                                                  # lane-dense store
        return carry

    if cb == 1:
        caption_body(0, 0)
    else:
        jax.lax.fori_loop(0, cb, caption_body, 0)


def _pick_cb(n_caps, target=4):
    # Block captions per grid step, but keep the grid length >= 2 (two TCs on v7x).
    cb = max(1, min(target, n_caps))
    while cb > 1 and (n_caps % cb != 0 or n_caps // cb < 2):
        cb -= 1
    return cb


def fused_caption_similarity(params, img_embs, cap_norm, keep_idx, drop_w, cap_lens, temp):
    B_v, L_v, C = img_embs.shape
    n_caps, W, _ = cap_norm.shape
    K = keep_idx.shape[-1]
    H = params['w1'].shape[1]
    P = params['w2'].shape[1]                 # keeped_patches
    tn = P + 1                                # aggregated tokens + extra token
    Hp = ((H + 7) // 8) * 8                   # pad hidden dim to a sublane multiple
    Pp = ((tn + 7) // 8) * 8                  # pad token slots to a sublane multiple
    out_lanes = ((B_v + 127) // 128) * 128    # lane-dense output rows

    cb = _pick_cb(n_caps)
    grid_len = n_caps // cb

    w1p = jnp.pad(params['w1'], ((0, 0), (0, Hp - H)))
    b1p = jnp.pad(params['b1'], ((0, 0), (0, Hp - H)))
    w2p = jnp.pad(params['w2'], ((0, Hp - H), (0, Pp - P)))
    b2p = jnp.pad(params['b2'], ((0, 0), (0, Pp - P)))

    temp = jnp.asarray(temp, jnp.float32)
    scalars = jnp.stack([params['scale'][0], 1.0 / temp]).astype(jnp.float32)
    lens_i32 = cap_lens.astype(jnp.int32)
    inv_lens = 1.0 / cap_lens.astype(jnp.float32)

    kernel = functools.partial(_fused_caption_kernel, tn=tn, cb=cb)
    out = pl.pallas_call(
        kernel,
        out_shape=jax.ShapeDtypeStruct((n_caps, 1, out_lanes), jnp.float32),
        grid=(grid_len,),
        in_specs=[
            pl.BlockSpec((B_v, L_v, C), lambda i: (0, 0, 0)),       # image tokens (resident)
            pl.BlockSpec((cb, W, C), lambda i: (i, 0, 0)),          # normalized caption block
            pl.BlockSpec((cb, B_v, K), lambda i: (i, 0, 0)),        # kept-token indices (int32)
            pl.BlockSpec((cb, B_v, L_v), lambda i: (i, 0, 0)),      # dropped-token softmax weights
            pl.BlockSpec(memory_space=pltpu.MemorySpace.SMEM),      # cap_lens
            pl.BlockSpec(memory_space=pltpu.MemorySpace.SMEM),      # 1/cap_lens
            pl.BlockSpec(memory_space=pltpu.MemorySpace.SMEM),      # [scale, 1/temp]
            pl.BlockSpec((1, C), lambda i: (0, 0)),                 # LN gamma
            pl.BlockSpec((1, C), lambda i: (0, 0)),                 # LN beta
            pl.BlockSpec((C, Hp), lambda i: (0, 0)),                # w1 (padded)
            pl.BlockSpec((1, Hp), lambda i: (0, 0)),                # b1 (padded)
            pl.BlockSpec((Hp, Pp), lambda i: (0, 0)),               # w2 (padded)
            pl.BlockSpec((1, Pp), lambda i: (0, 0)),                # b2 (padded)
            pl.BlockSpec((C, C), lambda i: (0, 0)),                 # i2t weight
            pl.BlockSpec((1, C), lambda i: (0, 0)),                 # i2t bias
            pl.BlockSpec((C, C), lambda i: (0, 0)),                 # t2i weight
            pl.BlockSpec((1, C), lambda i: (0, 0)),                 # t2i bias
        ],
        out_specs=pl.BlockSpec((cb, 1, out_lanes), lambda i: (i, 0, 0)),
        compiler_params=pltpu.CompilerParams(
            dimension_semantics=("parallel",)),
    )(img_embs, cap_norm, keep_idx.astype(jnp.int32), drop_w,
      lens_i32, inv_lens, scalars,
      params['ln_g'], params['ln_b'], w1p, b1p, w2p, b2p,
      params['wi2t'], params['bi2t'], params['wt2i'], params['bt2i'])
    return out[:, 0, :B_v].T                                         # (B_v, n_caps)


# ---------------------------------------------------------------- JAX glue (feeder)
def cross_sparse_aggr_forward(params, img_embs, cap_embs, cap_lens, opt):
    B_v, L_v, C = img_embs.shape
    n_caps, L_t, _ = cap_embs.shape
    assert is_sqr(L_v), "this configuration exercises the no-CLS-token path"
    assert not opt.use_cls_as_glob_embd and not opt.use_token_selection
    assert opt.similarity_calc_method == 'attn'
    # TODO(synk): CLS-token / TextSelection / 'max' / 'thres' branches are not exercised
    # for this configuration (the latter two depend on undefined mask_xattn_* helpers).

    img_norm = _l2norm(img_embs)
    cap_norm = _l2norm(cap_embs)

    # global image / caption attention scores (tiny; XLA fuses)
    glo = _l2norm(jnp.mean(img_embs, axis=1, keepdims=True))
    img_self_attn = jnp.sum(glo * img_norm, axis=-1)                 # (B_v, L_v)

    cap_lens = cap_lens.astype(jnp.int32)
    word_mask = (jnp.arange(L_t)[None, :] < cap_lens[:, None]).astype(jnp.float32)
    cap_mean = (jnp.sum(cap_embs * word_mask[..., None], axis=1)
                / cap_lens[:, None].astype(jnp.float32))
    cap_glo = _l2norm(cap_mean)
    cap_attn = jnp.einsum('ic,blc->ibl', cap_glo, img_norm)          # (n_caps, B_v, L_v)

    # TokenSparse feeder (data dependent): top_k + comparison mask, all captions at once.
    score = img_self_attn[None] + cap_attn                           # (n_caps, B_v, L_v)
    n_keep = math.ceil(L_v * opt.sparse_ratio)
    _, keep_idx = jax.lax.top_k(score, n_keep)                       # (n_caps, B_v, K)
    score_mask = jnp.sum(jax.nn.one_hot(keep_idx, L_v, dtype=jnp.float32), axis=2)
    drop_mask = 1.0 - score_mask
    drop_w = jax.nn.softmax(
        jnp.where(drop_mask > 0, score, -1e30), axis=-1) * drop_mask  # softmax over dropped

    temp = params['temp'] if opt.use_learnable_temp else 1.0
    improve_sims = fused_caption_similarity(
        params, img_embs, cap_norm, keep_idx, drop_w, cap_lens, temp)  # fused Pallas kernel
    return improve_sims, score_mask                                   # training-mode return


# ---------------------------------------------------------------- params
def init_params(key, opt):
    C = opt.embed_size
    H = int(C * 0.2)
    P = int(opt.num_patches * opt.aggr_ratio * opt.sparse_ratio)
    ks = jax.random.split(key, 4)

    def lin(k, fan_in, fan_out):  # weights stored transposed: y = x @ W + b
        return 0.02 * jax.random.normal(k, (fan_in, fan_out), jnp.float32)

    return {
        'ln_g': jnp.ones((1, C), jnp.float32),
        'ln_b': jnp.zeros((1, C), jnp.float32),
        'w1': lin(ks[0], C, H), 'b1': jnp.zeros((1, H), jnp.float32),
        'w2': lin(ks[1], H, P), 'b2': jnp.zeros((1, P), jnp.float32),
        'scale': jnp.ones((1,), jnp.float32),                        # TokenAggregation.scale
        'wi2t': lin(ks[2], C, C), 'bi2t': jnp.zeros((1, C), jnp.float32),
        'wt2i': lin(ks[3], C, C), 'bt2i': jnp.zeros((1, C), jnp.float32),
        'temp': jnp.ones((), jnp.float32),
    }


# ---------------------------------------------------------------- main
if __name__ == "__main__":
    opt = Opt()
    key = jax.random.PRNGKey(0)
    k_param, k_img, k_cap = jax.random.split(key, 3)

    B_v, L_v, C = 2, opt.num_patches, opt.embed_size                 # images
    n_caps, L_t = 2, 8                                               # captions
    img_embs = jax.random.normal(k_img, (B_v, L_v, C), jnp.float32)
    cap_embs = jax.random.normal(k_cap, (n_caps, L_t, C), jnp.float32)
    cap_lens = jnp.array([8, 6], jnp.int32)

    params = init_params(k_param, opt)

    fwd = jax.jit(functools.partial(cross_sparse_aggr_forward, opt=opt))
    improve_sims, score_mask_all = fwd(params, img_embs, cap_embs, cap_lens)
    jax.block_until_ready(improve_sims)
    jax.block_until_ready(score_mask_all)
    assert improve_sims.shape == (B_v, n_caps)
    assert score_mask_all.shape == (n_caps, B_v, L_v)
    assert bool(jnp.all(jnp.isfinite(improve_sims)))
    print("KERNEL_OK")
</pallas_src>

<mosaic_0001>
module attributes {stable_mosaic.version = 11 : i64} {
  func.func @_fused_caption_kernel(%arg0: i32, %arg1: memref<2x16x32xf32, #tpu.memory_space<vmem>>, %arg2: memref<1x8x32xf32, #tpu.memory_space<vmem>>, %arg3: memref<1x2x8xi32, #tpu.memory_space<vmem>>, %arg4: memref<1x2x16xf32, #tpu.memory_space<vmem>>, %arg5: memref<2xi32, #tpu.memory_space<smem>>, %arg6: memref<2xf32, #tpu.memory_space<smem>>, %arg7: memref<2xf32, #tpu.memory_space<smem>>, %arg8: memref<1x32xf32, #tpu.memory_space<vmem>>, %arg9: memref<1x32xf32, #tpu.memory_space<vmem>>, %arg10: memref<32x8xf32, #tpu.memory_space<vmem>>, %arg11: memref<1x8xf32, #tpu.memory_space<vmem>>, %arg12: memref<8x8xf32, #tpu.memory_space<vmem>>, %arg13: memref<1x8xf32, #tpu.memory_space<vmem>>, %arg14: memref<32x32xf32, #tpu.memory_space<vmem>>, %arg15: memref<1x32xf32, #tpu.memory_space<vmem>>, %arg16: memref<32x32xf32, #tpu.memory_space<vmem>>, %arg17: memref<1x32xf32, #tpu.memory_space<vmem>>, %arg18: memref<1x1x128xf32, #tpu.memory_space<vmem>>) attributes {dimension_semantics = [#tpu.dimension_semantics<parallel>], iteration_bounds = array<i64: 2>, scalar_prefetch = 0 : i64, scratch_operands = 0 : i64, tpu.core_type = #tpu.core_type<tc>, window_params = [{pipeline_mode = #tpu.pipeline_mode<synchronous>, transform_indices = @transform_0, window_bounds = array<i64: 2, 16, 32>}, {transform_indices = @transform_1, window_bounds = array<i64: 1, 8, 32>}, {transform_indices = @transform_2, window_bounds = array<i64: 1, 2, 8>}, {transform_indices = @transform_3, window_bounds = array<i64: 1, 2, 16>}, {transform_indices = @transform_4, window_bounds = array<i64: 2>}, {transform_indices = @transform_5, window_bounds = array<i64: 2>}, {transform_indices = @transform_6, window_bounds = array<i64: 2>}, {pipeline_mode = #tpu.pipeline_mode<synchronous>, transform_indices = @transform_7, window_bounds = array<i64: 1, 32>}, {pipeline_mode = #tpu.pipeline_mode<synchronous>, transform_indices = @transform_8, window_bounds = array<i64: 1, 32>}, {pipeline_mode = #tpu.pipeline_mode<synchronous>, transform_indices = @transform_9, window_bounds = array<i64: 32, 8>}, {pipeline_mode = #tpu.pipeline_mode<synchronous>, transform_indices = @transform_10, window_bounds = array<i64: 1, 8>}, {pipeline_mode = #tpu.pipeline_mode<synchronous>, transform_indices = @transform_11, window_bounds = array<i64: 8, 8>}, {pipeline_mode = #tpu.pipeline_mode<synchronous>, transform_indices = @transform_12, window_bounds = array<i64: 1, 8>}, {pipeline_mode = #tpu.pipeline_mode<synchronous>, transform_indices = @transform_13, window_bounds = array<i64: 32, 32>}, {pipeline_mode = #tpu.pipeline_mode<synchronous>, transform_indices = @transform_14, window_bounds = array<i64: 1, 32>}, {pipeline_mode = #tpu.pipeline_mode<synchronous>, transform_indices = @transform_15, window_bounds = array<i64: 32, 32>}, {pipeline_mode = #tpu.pipeline_mode<synchronous>, transform_indices = @transform_16, window_bounds = array<i64: 1, 32>}, {transform_indices = @transform_17, window_bounds = array<i64: 1, 1, 128>}]} {
    %c0 = arith.constant 0 : index
    %0 = memref.load %arg7[%c0] : memref<2xf32, #tpu.memory_space<smem>>
    %c1 = arith.constant 1 : index
    %1 = memref.load %arg7[%c1] : memref<2xf32, #tpu.memory_space<smem>>
    %c1_i32 = arith.constant 1 : i32
    %2 = arith.muli %arg0, %c1_i32 : i32
    %c0_i32 = arith.constant 0 : i32
    %3 = arith.addi %2, %c0_i32 : i32
    %4 = arith.index_cast %3 : i32 to index
    %5 = memref.load %arg5[%4] : memref<2xi32, #tpu.memory_space<smem>>
    %6 = arith.index_cast %3 : i32 to index
    %7 = memref.load %arg6[%6] : memref<2xf32, #tpu.memory_space<smem>>
    %c0_0 = arith.constant 0 : index
    %c0_1 = arith.constant 0 : index
    %c0_2 = arith.constant 0 : index
    %8 = vector.load %arg1[%c0_0, %c0_1, %c0_2] : memref<2x16x32xf32, #tpu.memory_space<vmem>>, vector<2x16x32xf32>
    %c0_3 = arith.constant 0 : index
    %c0_4 = arith.constant 0 : index
    %c0_5 = arith.constant 0 : index
    %9 = vector.load %arg2[%c0_3, %c0_4, %c0_5] : memref<1x8x32xf32, #tpu.memory_space<vmem>>, vector<1x8x32xf32>
    %10 = vector.shape_cast %9 : vector<1x8x32xf32> to vector<8x32xf32>
    %c0_6 = arith.constant 0 : index
    %c0_7 = arith.constant 0 : index
    %c0_8 = arith.constant 0 : index
    %11 = vector.load %arg3[%c0_6, %c0_7, %c0_8] : memref<1x2x8xi32, #tpu.memory_space<vmem>>, vector<1x2x8xi32>
    %12 = vector.shape_cast %11 : vector<1x2x8xi32> to vector<2x8xi32>
    %c0_9 = arith.constant 0 : index
    %c0_10 = arith.constant 0 : index
    %c0_11 = arith.constant 0 : index
    %13 = vector.load %arg4[%c0_9, %c0_10, %c0_11] : memref<1x2x16xf32, #tpu.memory_space<vmem>>, vector<1x2x16xf32>
    %14 = vector.shape_cast %13 : vector<1x2x16xf32> to vector<2x16xf32>
    %c0_12 = arith.constant 0 : index
    %c0_13 = arith.constant 0 : index
    %15 = vector.load %arg14[%c0_12, %c0_13] : memref<32x32xf32, #tpu.memory_space<vmem>>, vector<32x32xf32>
    %cst = arith.constant dense<0.000000e+00> : vector<8x32xf32>
    %16 = tpu.matmul %10, %15, %cst {dimension_numbers = #tpu.dot_dimension_numbers<[1], [0], [0], [1], [0, 0, 1, 1], [], []>} : vector<8x32xf32>, vector<32x32xf32>, vector<8x32xf32> -> vector<8x32xf32>
    %c0_14 = arith.constant 0 : index
    %c0_15 = arith.constant 0 : index
    %17 = vector.load %arg15[%c0_14, %c0_15] : memref<1x32xf32, #tpu.memory_space<vmem>>, vector<1x32xf32>
    %18 = vector.broadcast %17 : vector<1x32xf32> to vector<8x32xf32>
    %19 = arith.addf %16, %18 : vector<8x32xf32>
    %c0_16 = arith.constant 0 : index
    %c0_17 = arith.constant 0 : index
    %20 = vector.load %arg16[%c0_16, %c0_17] : memref<32x32xf32, #tpu.memory_space<vmem>>, vector<32x32xf32>
    %cst_18 = arith.constant dense<0.000000e+00> : vector<8x32xf32>
    %21 = tpu.matmul %10, %20, %cst_18 {dimension_numbers = #tpu.dot_dimension_numbers<[1], [0], [0], [1], [0, 0, 1, 1], [], []>} : vector<8x32xf32>, vector<32x32xf32>, vector<8x32xf32> -> vector<8x32xf32>
    %c0_19 = arith.constant 0 : index
    %c0_20 = arith.constant 0 : index
    %22 = vector.load %arg17[%c0_19, %c0_20] : memref<1x32xf32, #tpu.memory_space<vmem>>, vector<1x32xf32>
    %23 = vector.broadcast %22 : vector<1x32xf32> to vector<8x32xf32>
    %24 = arith.addf %21, %23 : vector<8x32xf32>
    %25 = tpu.concatenate %10, %19, %24 in 0 : vector<8x32xf32>, vector<8x32xf32>, vector<8x32xf32> -> vector<24x32xf32>
    %26 = tpu.iota {dimensions = array<i32: 0>} : vector<8x1xi32>
    %27 = vector.broadcast %5 : i32 to vector<8x1xi32>
    %28 = arith.cmpi slt, %26, %27 : vector<8x1xi32>
    %29 = arith.extui %28 : vector<8x1xi1> to vector<8x1xi32>
    %30 = arith.sitofp %29 : vector<8x1xi32> to vector<8x1xf32>
    %31 = vector.shape_cast %12 : vector<2x8xi32> to vector<2x8x1xi32>
    %32 = tpu.iota {dimensions = array<i32: 2>} : vector<2x8x16xi32>
    %33 = vector.broadcast %31 : vector<2x8x1xi32> to vector<2x8x16xi32>
    %34 = arith.cmpi eq, %33, %32 : vector<2x8x16xi32>
    %35 = arith.extui %34 : vector<2x8x16xi1> to vector<2x8x16xi32>
    %36 = arith.sitofp %35 : vector<2x8x16xi32> to vector<2x8x16xf32>
    "tpu.trace_start"() <{level = 10 : i32, message = "bkl,blc->bkc"}> : () -> ()
    %cst_21 = arith.constant dense<0.000000e+00> : vector<2x8x32xf32>
    %37 = tpu.matmul %36, %8, %cst_21 {dimension_numbers = #tpu.dot_dimension_numbers<[2], [1], [1], [2], [0, 0, 0, 1, 1, 2], [0], [0]>} : vector<2x8x16xf32>, vector<2x16x32xf32>, vector<2x8x32xf32> -> vector<2x8x32xf32>
    "tpu.trace_stop"() : () -> ()
    %38 = vector.shape_cast %14 : vector<2x16xf32> to vector<2x16x1xf32>
    %39 = vector.broadcast %38 : vector<2x16x1xf32> to vector<2x16x32xf32>
    %40 = arith.mulf %39, %8 : vector<2x16x32xf32>
    %cst_22 = arith.constant dense<0.000000e+00> : vector<2x32xf32>
    %41 = vector.multi_reduction <add>, %40, %cst_22 [1] : vector<2x16x32xf32> to vector<2x32xf32>
    %42 = vector.shape_cast %37 : vector<2x8x32xf32> to vector<16x32xf32>
    %cst_23 = arith.constant dense<0.000000e+00> : vector<16xf32>
    %43 = vector.multi_reduction <add>, %42, %cst_23 [1] : vector<16x32xf32> to vector<16xf32>
    %44 = vector.shape_cast %43 : vector<16xf32> to vector<16x1xf32>
    %cst_24 = arith.constant 3.200000e+01 : f32
    %45 = vector.broadcast %cst_24 : f32 to vector<16x1xf32>
    %46 = arith.divf %44, %45 : vector<16x1xf32>
    %47 = vector.broadcast %46 : vector<16x1xf32> to vector<16x32xf32>
    %48 = arith.subf %42, %47 : vector<16x32xf32>
    %49 = arith.mulf %48, %48 : vector<16x32xf32>
    %cst_25 = arith.constant dense<0.000000e+00> : vector<16xf32>
    %50 = vector.multi_reduction <add>, %49, %cst_25 [1] : vector<16x32xf32> to vector<16xf32>
    %51 = vector.shape_cast %50 : vector<16xf32> to vector<16x1xf32>
    %cst_26 = arith.constant 3.200000e+01 : f32
    %52 = vector.broadcast %cst_26 : f32 to vector<16x1xf32>
    %53 = arith.divf %51, %52 : vector<16x1xf32>
    %54 = vector.broadcast %46 : vector<16x1xf32> to vector<16x32xf32>
    %55 = arith.subf %42, %54 : vector<16x32xf32>
    %cst_27 = arith.constant 9.99999974E-6 : f32
    %56 = vector.broadcast %cst_27 : f32 to vector<16x1xf32>
    %57 = arith.addf %53, %56 : vector<16x1xf32>
    %58 = math.rsqrt %57 : vector<16x1xf32>
    %59 = vector.broadcast %58 : vector<16x1xf32> to vector<16x32xf32>
    %60 = arith.mulf %55, %59 : vector<16x32xf32>
    %c0_28 = arith.constant 0 : index
    %c0_29 = arith.constant 0 : index
    %61 = vector.load %arg8[%c0_28, %c0_29] : memref<1x32xf32, #tpu.memory_space<vmem>>, vector<1x32xf32>
    %62 = vector.broadcast %61 : vector<1x32xf32> to vector<16x32xf32>
    %63 = arith.mulf %60, %62 : vector<16x32xf32>
    %c0_30 = arith.constant 0 : index
    %c0_31 = arith.constant 0 : index
    %64 = vector.load %arg9[%c0_30, %c0_31] : memref<1x32xf32, #tpu.memory_space<vmem>>, vector<1x32xf32>
    %65 = vector.broadcast %64 : vector<1x32xf32> to vector<16x32xf32>
    %66 = arith.addf %63, %65 : vector<16x32xf32>
    %c0_32 = arith.constant 0 : index
    %c0_33 = arith.constant 0 : index
    %67 = vector.load %arg10[%c0_32, %c0_33] : memref<32x8xf32, #tpu.memory_space<vmem>>, vector<32x8xf32>
    %cst_34 = arith.constant dense<0.000000e+00> : vector<16x8xf32>
    %68 = tpu.matmul %66, %67, %cst_34 {dimension_numbers = #tpu.dot_dimension_numbers<[1], [0], [0], [1], [0, 0, 1, 1], [], []>} : vector<16x32xf32>, vector<32x8xf32>, vector<16x8xf32> -> vector<16x8xf32>
    %c0_35 = arith.constant 0 : index
    %c0_36 = arith.constant 0 : index
    %69 = vector.load %arg11[%c0_35, %c0_36] : memref<1x8xf32, #tpu.memory_space<vmem>>, vector<1x8xf32>
    %70 = vector.broadcast %69 : vector<1x8xf32> to vector<16x8xf32>
    %71 = arith.addf %68, %70 : vector<16x8xf32>
    %cst_37 = arith.constant 5.000000e-01 : f32
    %72 = vector.broadcast %cst_37 : f32 to vector<16x8xf32>
    %73 = arith.mulf %72, %71 : vector<16x8xf32>
    %cst_38 = arith.constant 0.707106769 : f32
    %74 = vector.broadcast %cst_38 : f32 to vector<16x8xf32>
    %75 = arith.mulf %71, %74 : vector<16x8xf32>
    %cst_39 = arith.constant 0.000000e+00 : f32
    %76 = vector.broadcast %cst_39 : f32 to vector<16x8xf32>
    %77 = arith.cmpf oge, %75, %76 : vector<16x8xf32>
    %cst_40 = arith.constant 1.000000e+00 : f32
    %cst_41 = arith.constant -1.000000e+00 : f32
    %78 = vector.broadcast %cst_40 : f32 to vector<16x8xf32>
    %79 = vector.broadcast %cst_41 : f32 to vector<16x8xf32>
    %80 = arith.select %77, %78, %79 : vector<16x8xi1>, vector<16x8xf32>
    %81 = math.absf %75 : vector<16x8xf32>
    %cst_42 = arith.constant 0.327591091 : f32
    %82 = vector.broadcast %cst_42 : f32 to vector<16x8xf32>
    %83 = arith.mulf %82, %81 : vector<16x8xf32>
    %cst_43 = arith.constant 1.000000e+00 : f32
    %84 = vector.broadcast %cst_43 : f32 to vector<16x8xf32>
    %85 = arith.addf %84, %83 : vector<16x8xf32>
    %cst_44 = arith.constant 1.000000e+00 : f32
    %86 = vector.broadcast %cst_44 : f32 to vector<16x8xf32>
    %87 = arith.divf %86, %85 : vector<16x8xf32>
    %cst_45 = arith.constant 1.06140542 : f32
    %88 = vector.broadcast %cst_45 : f32 to vector<16x8xf32>
    %89 = arith.mulf %88, %87 : vector<16x8xf32>
    %cst_46 = arith.constant -1.45315206 : f32
    %90 = vector.broadcast %cst_46 : f32 to vector<16x8xf32>
    %91 = arith.addf %89, %90 : vector<16x8xf32>
    %92 = arith.mulf %91, %87 : vector<16x8xf32>
    %cst_47 = arith.constant 1.42141378 : f32
    %93 = vector.broadcast %cst_47 : f32 to vector<16x8xf32>
    %94 = arith.addf %92, %93 : vector<16x8xf32>
    %95 = arith.mulf %94, %87 : vector<16x8xf32>
    %cst_48 = arith.constant -0.284496725 : f32
    %96 = vector.broadcast %cst_48 : f32 to vector<16x8xf32>
    %97 = arith.addf %95, %96 : vector<16x8xf32>
    %98 = arith.mulf %97, %87 : vector<16x8xf32>
    %cst_49 = arith.constant 0.254829586 : f32
    %99 = vector.broadcast %cst_49 : f32 to vector<16x8xf32>
    %100 = arith.addf %98, %99 : vector<16x8xf32>
    %101 = arith.mulf %100, %87 : vector<16x8xf32>
    %cst_50 = arith.constant 0.000000e+00 : f32
    %102 = vector.broadcast %cst_50 : f32 to vector<16x8xf32>
    %103 = arith.subf %102, %81 : vector<16x8xf32>
    %104 = arith.mulf %103, %81 : vector<16x8xf32>
    %105 = math.exp %104 : vector<16x8xf32>
    %106 = arith.mulf %101, %105 : vector<16x8xf32>
    %cst_51 = arith.constant 1.000000e+00 : f32
    %107 = vector.broadcast %cst_51 : f32 to vector<16x8xf32>
    %108 = arith.subf %107, %106 : vector<16x8xf32>
    %109 = arith.mulf %80, %108 : vector<16x8xf32>
    %cst_52 = arith.constant 1.000000e+00 : f32
    %110 = vector.broadcast %cst_52 : f32 to vector<16x8xf32>
    %111 = arith.addf %110, %109 : vector<16x8xf32>
    %112 = arith.mulf %73, %111 : vector<16x8xf32>
    %c0_53 = arith.constant 0 : index
    %c0_54 = arith.constant 0 : index
    %113 = vector.load %arg12[%c0_53, %c0_54] : memref<8x8xf32, #tpu.memory_space<vmem>>, vector<8x8xf32>
    %cst_55 = arith.constant dense<0.000000e+00> : vector<16x8xf32>
    %114 = tpu.matmul %112, %113, %cst_55 {dimension_numbers = #tpu.dot_dimension_numbers<[1], [0], [0], [1], [0, 0, 1, 1], [], []>} : vector<16x8xf32>, vector<8x8xf32>, vector<16x8xf32> -> vector<16x8xf32>
    %c0_56 = arith.constant 0 : index
    %c0_57 = arith.constant 0 : index
    %115 = vector.load %arg13[%c0_56, %c0_57] : memref<1x8xf32, #tpu.memory_space<vmem>>, vector<1x8xf32>
    %116 = vector.broadcast %115 : vector<1x8xf32> to vector<16x8xf32>
    %117 = arith.addf %114, %116 : vector<16x8xf32>
    %118 = vector.broadcast %0 : f32 to vector<16x8xf32>
    %119 = arith.mulf %117, %118 : vector<16x8xf32>
    %120 = vector.shape_cast %119 : vector<16x8xf32> to vector<2x8x8xf32>
    %cst_58 = arith.constant dense<0xFF800000> : vector<2x8xf32>
    %121 = vector.multi_reduction <maximumf>, %120, %cst_58 [1] : vector<2x8x8xf32> to vector<2x8xf32>
    %122 = vector.shape_cast %121 : vector<2x8xf32> to vector<2x1x8xf32>
    %123 = vector.broadcast %122 : vector<2x1x8xf32> to vector<2x8x8xf32>
    %124 = arith.subf %120, %123 : vector<2x8x8xf32>
    %125 = math.exp %124 : vector<2x8x8xf32>
    %cst_59 = arith.constant dense<0.000000e+00> : vector<2x8xf32>
    %126 = vector.multi_reduction <add>, %125, %cst_59 [1] : vector<2x8x8xf32> to vector<2x8xf32>
    %127 = vector.shape_cast %126 : vector<2x8xf32> to vector<2x1x8xf32>
    %128 = tpu.reciprocal %127 {approx = true} : vector<2x1x8xf32> -> vector<2x1x8xf32>
    %129 = vector.broadcast %128 : vector<2x1x8xf32> to vector<2x8x8xf32>
    %130 = arith.mulf %125, %129 : vector<2x8x8xf32>
    %131 = vector.shape_cast %130 : vector<2x8x8xf32> to vector<2x8x8x1xf32>
    %132 = vector.shape_cast %37 : vector<2x8x32xf32> to vector<2x8x1x32xf32>
    %133 = vector.broadcast %131 : vector<2x8x8x1xf32> to vector<2x8x8x32xf32>
    %134 = vector.broadcast %132 : vector<2x8x1x32xf32> to vector<2x8x8x32xf32>
    %135 = arith.mulf %133, %134 : vector<2x8x8x32xf32>
    %cst_60 = arith.constant dense<0.000000e+00> : vector<2x8x32xf32>
    %136 = vector.multi_reduction <add>, %135, %cst_60 [1] : vector<2x8x8x32xf32> to vector<2x8x32xf32>
    %137 = tpu.iota {dimensions = array<i32: 1>} : vector<1x8x1xi32>
    %c4_i32 = arith.constant 4 : i32
    %138 = vector.broadcast %c4_i32 : i32 to vector<1x8x1xi32>
    %139 = arith.cmpi eq, %137, %138 : vector<1x8x1xi32>
    %140 = vector.shape_cast %41 : vector<2x32xf32> to vector<2x1x32xf32>
    %141 = vector.shape_cast %139 : vector<1x8x1xi1> to vector<1x8x1xi1>
    %142 = vector.broadcast %141 : vector<1x8x1xi1> to vector<2x8x32xi1>
    %143 = vector.shape_cast %140 : vector<2x1x32xf32> to vector<2x1x32xf32>
    %144 = vector.broadcast %143 : vector<2x1x32xf32> to vector<2x8x32xf32>
    %145 = arith.select %142, %144, %136 : vector<2x8x32xi1>, vector<2x8x32xf32>
    %146 = arith.mulf %145, %145 : vector<2x8x32xf32>
    %cst_61 = arith.constant dense<0.000000e+00> : vector<2x8xf32>
    %147 = vector.multi_reduction <add>, %146, %cst_61 [2] : vector<2x8x32xf32> to vector<2x8xf32>
    %148 = vector.shape_cast %147 : vector<2x8xf32> to vector<2x8x1xf32>
    %cst_62 = arith.constant 1.000000e-24 : f32
    %149 = vector.broadcast %cst_62 : f32 to vector<2x8x1xf32>
    %150 = arith.maximumf %148, %149 : vector<2x8x1xf32>
    %151 = math.rsqrt %150 : vector<2x8x1xf32>
    %152 = vector.broadcast %151 : vector<2x8x1xf32> to vector<2x8x32xf32>
    %153 = arith.mulf %145, %152 : vector<2x8x32xf32>
    %154 = vector.shape_cast %153 : vector<2x8x32xf32> to vector<16x32xf32>
    %cst_63 = arith.constant dense<0.000000e+00> : vector<24x16xf32>
    %155 = tpu.matmul %25, %154, %cst_63 {dimension_numbers = #tpu.dot_dimension_numbers<[1], [1], [0], [0], [0, 0, 1, 0], [], []>} : vector<24x32xf32>, vector<16x32xf32>, vector<24x16xf32> -> vector<24x16xf32>
    %156 = vector.extract_strided_slice %155 {offsets = [0, 0], sizes = [8, 16], strides = [1, 1]} : vector<24x16xf32> to vector<8x16xf32>
    %cst_64 = arith.constant 0.000000e+00 : f32
    %157 = vector.broadcast %cst_64 : f32 to vector<8x16xf32>
    %158 = arith.cmpf oge, %156, %157 : vector<8x16xf32>
    %cst_65 = arith.constant 1.000000e-01 : f32
    %159 = vector.broadcast %cst_65 : f32 to vector<8x16xf32>
    %160 = arith.mulf %159, %156 : vector<8x16xf32>
    %161 = arith.select %158, %156, %160 : vector<8x16xi1>, vector<8x16xf32>
    %162 = vector.extract_strided_slice %155 {offsets = [8, 0], sizes = [8, 16], strides = [1, 1]} : vector<24x16xf32> to vector<8x16xf32>
    %163 = vector.broadcast %1 : f32 to vector<8x16xf32>
    %164 = arith.mulf %162, %163 : vector<8x16xf32>
    %165 = vector.extract_strided_slice %155 {offsets = [16, 0], sizes = [8, 16], strides = [1, 1]} : vector<24x16xf32> to vector<8x16xf32>
    %166 = vector.broadcast %1 : f32 to vector<8x16xf32>
    %167 = arith.mulf %165, %166 : vector<8x16xf32>
    %168 = tpu.iota {dimensions = array<i32: 0>} : vector<16x128xi32>
    %169 = tpu.iota {dimensions = array<i32: 1>} : vector<16x128xi32>
    %c8_i32 = arith.constant 8 : i32
    %170 = vector.broadcast %c8_i32 : i32 to vector<16x128xi32>
    %171 = arith.muli %169, %170 : vector<16x128xi32>
    %172 = arith.cmpi sge, %168, %171 : vector<16x128xi32>
    %c5_i32 = arith.constant 5 : i32
    %173 = vector.broadcast %c5_i32 : i32 to vector<16x128xi32>
    %174 = arith.addi %171, %173 : vector<16x128xi32>
    %175 = arith.cmpi slt, %168, %174 : vector<16x128xi32>
    %176 = arith.andi %172, %175 : vector<16x128xi1>
    %177 = arith.extui %176 : vector<16x128xi1> to vector<16x128xi32>
    %178 = arith.sitofp %177 : vector<16x128xi32> to vector<16x128xf32>
    %cst_66 = arith.constant 0.000000e+00 : f32
    %179 = vector.broadcast %cst_66 : f32 to vector<8x1xf32>
    %180 = arith.cmpf ogt, %30, %179 : vector<8x1xf32>
    %cst_67 = arith.constant -1.000000e+30 : f32
    %181 = vector.shape_cast %180 : vector<8x1xi1> to vector<8x1xi1>
    %182 = vector.broadcast %181 : vector<8x1xi1> to vector<8x16xi1>
    %183 = vector.broadcast %cst_67 : f32 to vector<8x16xf32>
    %184 = arith.select %182, %164, %183 : vector<8x16xi1>, vector<8x16xf32>
    %cst_68 = arith.constant dense<0xFF800000> : vector<16xf32>
    %185 = vector.multi_reduction <maximumf>, %184, %cst_68 [0] : vector<8x16xf32> to vector<16xf32>
    %186 = vector.shape_cast %185 : vector<16xf32> to vector<1x16xf32>
    %187 = vector.broadcast %186 : vector<1x16xf32> to vector<8x16xf32>
    %188 = arith.subf %184, %187 : vector<8x16xf32>
    %189 = math.exp %188 : vector<8x16xf32>
    %cst_69 = arith.constant dense<0.000000e+00> : vector<16xf32>
    %190 = vector.multi_reduction <add>, %189, %cst_69 [0] : vector<8x16xf32> to vector<16xf32>
    %191 = vector.shape_cast %190 : vector<16xf32> to vector<1x16xf32>
    %192 = tpu.reciprocal %191 {approx = true} : vector<1x16xf32> -> vector<1x16xf32>
    %193 = vector.broadcast %192 : vector<1x16xf32> to vector<8x16xf32>
    %194 = arith.mulf %189, %193 : vector<8x16xf32>
    %cst_70 = arith.constant dense<0xFF800000> : vector<8xf32>
    %195 = vector.multi_reduction <maximumf>, %167, %cst_70 [1] : vector<8x16xf32> to vector<8xf32>
    %196 = vector.shape_cast %195 : vector<8xf32> to vector<8x1xf32>
    %197 = vector.broadcast %196 : vector<8x1xf32> to vector<8x16xf32>
    %198 = arith.subf %167, %197 : vector<8x16xf32>
    %199 = math.exp %198 : vector<8x16xf32>
    %cst_71 = arith.constant dense<0.000000e+00> : vector<8x128xf32>
    %200 = tpu.matmul %199, %178, %cst_71 {dimension_numbers = #tpu.dot_dimension_numbers<[1], [0], [0], [1], [0, 0, 1, 1], [], []>} : vector<8x16xf32>, vector<16x128xf32>, vector<8x128xf32> -> vector<8x128xf32>
    %cst_72 = arith.constant dense<0.000000e+00> : vector<8x16xf32>
    %201 = tpu.matmul %200, %178, %cst_72 {dimension_numbers = #tpu.dot_dimension_numbers<[1], [1], [0], [0], [0, 0, 1, 0], [], []>} : vector<8x128xf32>, vector<16x128xf32>, vector<8x16xf32> -> vector<8x16xf32>
    %cst_73 = arith.constant 0.000000e+00 : f32
    %202 = vector.broadcast %cst_73 : f32 to vector<8x16xf32>
    %203 = arith.cmpf ogt, %201, %202 : vector<8x16xf32>
    %cst_74 = arith.constant 1.000000e-30 : f32
    %204 = vector.broadcast %cst_74 : f32 to vector<8x16xf32>
    %205 = arith.maximumf %201, %204 : vector<8x16xf32>
    %206 = tpu.reciprocal %205 {approx = true} : vector<8x16xf32> -> vector<8x16xf32>
    %207 = arith.mulf %199, %206 : vector<8x16xf32>
    %cst_75 = arith.constant 0.000000e+00 : f32
    %208 = vector.broadcast %cst_75 : f32 to vector<8x16xf32>
    %209 = arith.select %203, %207, %208 : vector<8x16xi1>, vector<8x16xf32>
    %210 = arith.mulf %194, %161 : vector<8x16xf32>
    %cst_76 = arith.constant 2.000000e-01 : f32
    %211 = vector.broadcast %cst_76 : f32 to vector<8x16xf32>
    %212 = arith.mulf %210, %211 : vector<8x16xf32>
    %213 = arith.mulf %209, %161 : vector<8x16xf32>
    %214 = vector.broadcast %7 : f32 to vector<8x16xf32>
    %215 = arith.mulf %213, %214 : vector<8x16xf32>
    %216 = arith.addf %212, %215 : vector<8x16xf32>
    %217 = vector.broadcast %30 : vector<8x1xf32> to vector<8x16xf32>
    %218 = arith.mulf %216, %217 : vector<8x16xf32>
    %cst_77 = arith.constant dense<0.000000e+00> : vector<16xf32>
    %219 = vector.multi_reduction <add>, %218, %cst_77 [0] : vector<8x16xf32> to vector<16xf32>
    %220 = vector.shape_cast %219 : vector<16xf32> to vector<1x16xf32>
    %cst_78 = arith.constant dense<0.000000e+00> : vector<1x128xf32>
    %221 = tpu.matmul %220, %178, %cst_78 {dimension_numbers = #tpu.dot_dimension_numbers<[1], [0], [0], [1], [0, 0, 1, 1], [], []>} : vector<1x16xf32>, vector<16x128xf32>, vector<1x128xf32> -> vector<1x128xf32>
    %c0_79 = arith.constant 0 : index
    %c0_80 = arith.constant 0 : index
    %c0_81 = arith.constant 0 : index
    %222 = vector.load %arg18[%c0_79, %c0_80, %c0_81] : memref<1x1x128xf32, #tpu.memory_space<vmem>>, vector<1x1x128xf32>
    %223 = vector.shape_cast %222 : vector<1x1x128xf32> to vector<1x128xf32>
    %224 = vector.shape_cast %221 : vector<1x128xf32> to vector<1x1x128xf32>
    tpu.vector_store %arg18[%c0_79, %c0_80, %c0_81], %224 {strides = array<i32>} : memref<1x1x128xf32, #tpu.memory_space<vmem>>, vector<1x1x128xf32>,
    return
  }
  func.func @transform_0(%arg0: i32) -> (i32, i32, i32) {
    %c0_i32 = arith.constant 0 : i32
    %c0_i32_0 = arith.constant 0 : i32
    %c0_i32_1 = arith.constant 0 : i32
    %c0_i32_2 = arith.constant 0 : i32
    return %c0_i32, %c0_i32_0, %c0_i32_1 : i32, i32, i32
  }
  func.func @transform_1(%arg0: i32) -> (i32, i32, i32) {
    %c0_i32 = arith.constant 0 : i32
    %c0_i32_0 = arith.constant 0 : i32
    %c0_i32_1 = arith.constant 0 : i32
    return %arg0, %c0_i32, %c0_i32_0 : i32, i32, i32
  }
  func.func @transform_2(%arg0: i32) -> (i32, i32, i32) {
    %c0_i32 = arith.constant 0 : i32
    %c0_i32_0 = arith.constant 0 : i32
    %c0_i32_1 = arith.constant 0 : i32
    return %arg0, %c0_i32, %c0_i32_0 : i32, i32, i32
  }
  func.func @transform_3(%arg0: i32) -> (i32, i32, i32) {
    %c0_i32 = arith.constant 0 : i32
    %c0_i32_0 = arith.constant 0 : i32
    %c0_i32_1 = arith.constant 0 : i32
    return %arg0, %c0_i32, %c0_i32_0 : i32, i32, i32
  }
  func.func @transform_4(%arg0: i32) -> i32 {
    %c0_i32 = arith.constant 0 : i32
    %c0_i32_0 = arith.constant 0 : i32
    return %c0_i32 : i32
  }
  func.func @transform_5(%arg0: i32) -> i32 {
    %c0_i32 = arith.constant 0 : i32
    %c0_i32_0 = arith.constant 0 : i32
    return %c0_i32 : i32
  }
  func.func @transform_6(%arg0: i32) -> i32 {
    %c0_i32 = arith.constant 0 : i32
    %c0_i32_0 = arith.constant 0 : i32
    return %c0_i32 : i32
  }
  func.func @transform_7(%arg0: i32) -> (i32, i32) {
    %c0_i32 = arith.constant 0 : i32
    %c0_i32_0 = arith.constant 0 : i32
    %c0_i32_1 = arith.constant 0 : i32
    return %c0_i32, %c0_i32_0 : i32, i32
  }
  func.func @transform_8(%arg0: i32) -> (i32, i32) {
    %c0_i32 = arith.constant 0 : i32
    %c0_i32_0 = arith.constant 0 : i32
    %c0_i32_1 = arith.constant 0 : i32
    return %c0_i32, %c0_i32_0 : i32, i32
  }
  func.func @transform_9(%arg0: i32) -> (i32, i32) {
    %c0_i32 = arith.constant 0 : i32
    %c0_i32_0 = arith.constant 0 : i32
    %c0_i32_1 = arith.constant 0 : i32
    return %c0_i32, %c0_i32_0 : i32, i32
  }
  func.func @transform_10(%arg0: i32) -> (i32, i32) {
    %c0_i32 = arith.constant 0 : i32
    %c0_i32_0 = arith.constant 0 : i32
    %c0_i32_1 = arith.constant 0 : i32
    return %c0_i32, %c0_i32_0 : i32, i32
  }
  func.func @transform_11(%arg0: i32) -> (i32, i32) {
    %c0_i32 = arith.constant 0 : i32
    %c0_i32_0 = arith.constant 0 : i32
    %c0_i32_1 = arith.constant 0 : i32
    return %c0_i32, %c0_i32_0 : i32, i32
  }
  func.func @transform_12(%arg0: i32) -> (i32, i32) {
    %c0_i32 = arith.constant 0 : i32
    %c0_i32_0 = arith.constant 0 : i32
    %c0_i32_1 = arith.constant 0 : i32
    return %c0_i32, %c0_i32_0 : i32, i32
  }
  func.func @transform_13(%arg0: i32) -> (i32, i32) {
    %c0_i32 = arith.constant 0 : i32
    %c0_i32_0 = arith.constant 0 : i32
    %c0_i32_1 = arith.constant 0 : i32
    return %c0_i32, %c0_i32_0 : i32, i32
  }
  func.func @transform_14(%arg0: i32) -> (i32, i32) {
    %c0_i32 = arith.constant 0 : i32
    %c0_i32_0 = arith.constant 0 : i32
    %c0_i32_1 = arith.constant 0 : i32
    return %c0_i32, %c0_i32_0 : i32, i32
  }
  func.func @transform_15(%arg0: i32) -> (i32, i32) {
    %c0_i32 = arith.constant 0 : i32
    %c0_i32_0 = arith.constant 0 : i32
    %c0_i32_1 = arith.constant 0 : i32
    return %c0_i32, %c0_i32_0 : i32, i32
  }
  func.func @transform_16(%arg0: i32) -> (i32, i32) {
    %c0_i32 = arith.constant 0 : i32
    %c0_i32_0 = arith.constant 0 : i32
    %c0_i32_1 = arith.constant 0 : i32
    return %c0_i32, %c0_i32_0 : i32, i32
  }
  func.func @transform_17(%arg0: i32) -> (i32, i32, i32) {
    %c0_i32 = arith.constant 0 : i32
    %c0_i32_0 = arith.constant 0 : i32
    %c0_i32_1 = arith.constant 0 : i32
    return %arg0, %c0_i32, %c0_i32_0 : i32, i32, i32
  }
}

</mosaic_0001>

<llo_original>
// kernel: cross_sparse_aggr_forward.1
$region0: #{cross_sparse_aggr_forward.1}
  #allocation0 [shape = 'u32[]', space=smem, size = 0x4, offset = 0x4, fixed_abs, tag = 'smem constant byte address 0x4 - core index']
  #allocation1 [shape = 'u32[144,128]{1,0:T(1,128)}', space=vmem, size = 0x12000, scoped, tag = 'internal scratch']
  %s0 = inlined_call_operand.vmem [shape: f32[2,16,32], index: 0, kind: input, shape index: {}]
  %s1 = inlined_call_operand.vmem [shape: f32[2,8,32], index: 1, kind: input, shape index: {}]
  %s2 = inlined_call_operand.vmem [shape: s32[2,2,8], index: 2, kind: input, shape index: {}]
  %s3 = inlined_call_operand.vmem [shape: f32[2,2,16], index: 3, kind: input, shape index: {}]
  %s4 = inlined_call_operand.vmem [shape: s32[2], index: 4, kind: input, shape index: {}]
  %s5 = inlined_call_operand.vmem [shape: f32[2], index: 5, kind: input, shape index: {}]
  %s6 = inlined_call_operand.vmem [shape: f32[2], index: 6, kind: input, shape index: {}]
  %s7 = inlined_call_operand.vmem [shape: f32[1,32], index: 7, kind: input, shape index: {}]
  %s8 = inlined_call_operand.vmem [shape: f32[1,32], index: 8, kind: input, shape index: {}]
  %s9 = inlined_call_operand.vmem [shape: f32[32,8], index: 9, kind: input, shape index: {}]
  %s10 = inlined_call_operand.vmem [shape: f32[1,8], index: 10, kind: input, shape index: {}]
  %s11 = inlined_call_operand.vmem [shape: f32[8,8], index: 11, kind: input, shape index: {}]
  %s12 = inlined_call_operand.vmem [shape: f32[1,8], index: 12, kind: input, shape index: {}]
  %s13 = inlined_call_operand.vmem [shape: f32[32,32], index: 13, kind: input, shape index: {}]
  %s14 = inlined_call_operand.vmem [shape: f32[1,32], index: 14, kind: input, shape index: {}]
  %s15 = inlined_call_operand.vmem [shape: f32[32,32], index: 15, kind: input, shape index: {}]
  %s16 = inlined_call_operand.vmem [shape: f32[1,32], index: 16, kind: input, shape index: {}]
  %s17 = inlined_call_operand.vmem [shape: f32[2,1,128], index: 17, kind: output, shape index: {}]
  %s18 = sld [smem:[#allocation0]]
  $region113: #{cross_sparse_aggr_forward.1} parent=0
    _
  %s20 = ssub.s32 1, %s18
  %s21 = scalar_select 0, %s20, %s18
  $region1: #{cross_sparse_aggr_forward.1} parent=0
    #allocation2 [shape = 'u8[512]{0}', space=smem, size = 0x200, scoped, tag = 'input window, operand 4, single buffered']
    #allocation3 [shape = 's32[2]{0}', space=sflag, size = 0x8, scoped, tag = 'scoped memory for cross_sparse_aggr_forward.1']
    #allocation4 [shape = 'u8[512]{0}', space=smem, size = 0x200, scoped, tag = 'input window, operand 5, single buffered']
    #allocation5 [shape = 's32[1]{0}', space=sflag, size = 0x4, scoped, tag = 'scoped memory for cross_sparse_aggr_forward.1']
    #allocation6 [shape = 'u8[512]{0}', space=smem, size = 0x200, scoped, tag = 'input window, operand 6, single buffered']
    %22 = vsyncpa [#allocation3], 0
    %23 = vsyncpa [#allocation5], 0
    loop: start=0, step=1, limit=4
    $region2: #{cross_sparse_aggr_forward.1} parent=1 // loop_pre_header
      _
    $region3: #{cross_sparse_aggr_forward.1} parent=1 // loop_header
      %s25 = sphi 0, %s29
      %p26 = scmp.ge.s32.totalorder %s25, 4
      %s33 = sphi 0, %s33
      %s35 = sphi 0, %s33
      %s36 = sphi 0, %s35
      %s50 = sphi 0, %s36
      %s56 = sphi 0, %s58
      %s59 = sphi 0, %s56
      %s60 = sphi 0, %s59
      %s76 = sphi 0, %s60
      %s82 = sphi 0, %s84
      %s85 = sphi 0, %s82
      %s86 = sphi 0, %s85
      %s102 = sphi 0, %s86
      %s108 = sphi 0, %s110
      %s111 = sphi 0, %s108
      %s112 = sphi 0, %s111
      %s128 = sphi 0, %s112
      %s132 = sphi 0, %s132
      %s134 = sphi 0, %s132
      %s135 = sphi 0, %s134
      %s149 = sphi 0, %s135
      %s153 = sphi 0, %s153
      %s155 = sphi 0, %s153
      %s156 = sphi 0, %s155
      %s170 = sphi 0, %s156
      %s174 = sphi 0, %s174
      %s176 = sphi 0, %s174
      %s177 = sphi 0, %s176
      %s191 = sphi 0, %s177
      %s195 = sphi 0, %s195
      %s197 = sphi 0, %s195
      %s198 = sphi 0, %s197
      %s212 = sphi 0, %s198
      %s216 = sphi 0, %s216
      %s218 = sphi 0, %s216
      %s219 = sphi 0, %s218
      %s233 = sphi 0, %s219
      %s237 = sphi 0, %s237
      %s239 = sphi 0, %s237
      %s240 = sphi 0, %s239
      %s254 = sphi 0, %s240
      %s258 = sphi 0, %s258
      %s260 = sphi 0, %s258
      %s261 = sphi 0, %s260
      %s275 = sphi 0, %s261
      %s279 = sphi 0, %s279
      %s281 = sphi 0, %s279
      %s282 = sphi 0, %s281
      %s296 = sphi 0, %s282
      %s300 = sphi 0, %s300
      %s302 = sphi 0, %s300
      %s303 = sphi 0, %s302
      %s317 = sphi 0, %s303
      %s321 = sphi 0, %s321
      %s323 = sphi 0, %s321
      %s324 = sphi 0, %s323
      %s338 = sphi 0, %s324
      %s342 = sphi 0, %s342
      %s344 = sphi 0, %s342
      %s345 = sphi 0, %s344
      %s359 = sphi 0, %s345
      %s363 = sphi 0, %s363
      %s365 = sphi 0, %s363
      %s366 = sphi 0, %s365
      %s380 = sphi 0, %s366
      %s384 = sphi 0, %s384
      %s386 = sphi 0, %s384
      %s387 = sphi 0, %s386
      %s401 = sphi 0, %s387
      %s407 = sphi 0, %s409
      %s410 = sphi 0, %s407
      %s411 = sphi 0, %s410
      %s427 = sphi 0, %s411
    $region4: #{cross_sparse_aggr_forward.1} parent=1 // loop_header_branch
      %28 = sbr.rel (%p26) target = $region8
    $region5: #{cross_sparse_aggr_forward.1} parent=1 // loop_body
      %s30 = ssub.s32 %s25, 1
      %s31 = ssub.s32 %s25, 2
      %s32 = sadd.s32 %s25, 1
      %s34 = sadd.s32 %s33, 1
      %p37 = scmp.eq.s32.totalorder %s25, 1
      %p38 = scmp.ne.s32.totalorder %s33, %s35
      %p39 = scmp.eq.s32.totalorder %s25, 0
      %p40 = por %p38, %p39
      %p41 = scmp.ne.s32.totalorder %s33, %s35
      %p42 = scmp.eq.s32.totalorder %s30, 1
      %p43 = por %p41, %p42
      %p44 = scmp.ne.s32.totalorder %s35, %s36
      %p45 = scmp.eq.s32.totalorder %s30, 0
      %p46 = por %p44, %p45
      %p47 = scmp.ne.s32.totalorder %s35, %s36
      %p48 = scmp.eq.s32.totalorder %s31, 1
      %p49 = por %p47, %p48
      %p51 = scmp.ne.s32.totalorder %s36, %s50
      %p52 = scmp.eq.s32.totalorder %s31, 0
      %p53 = por %p51, %p52
      %s54 = ssub.s32 %s25, %s32
      %p55 = scmp.eq.s32.totalorder %s54, 0
      %s57 = sadd.s32 %s56, 1
      %s58 = scalar_select %p55, %s56, %s57
      %p61 = pneg %p55
      %p62 = scmp.eq.s32.totalorder %s25, 1
      %p63 = por %p61, %p62
      %p64 = scmp.ne.s32.totalorder %s56, %s59
      %p65 = scmp.eq.s32.totalorder %s25, 0
      %p66 = por %p64, %p65
      %p67 = scmp.ne.s32.totalorder %s56, %s59
      %p68 = scmp.eq.s32.totalorder %s30, 1
      %p69 = por %p67, %p68
      %p70 = scmp.ne.s32.totalorder %s59, %s60
      %p71 = scmp.eq.s32.totalorder %s30, 0
      %p72 = por %p70, %p71
      %p73 = scmp.ne.s32.totalorder %s59, %s60
      %p74 = scmp.eq.s32.totalorder %s31, 1
      %p75 = por %p73, %p74
      %p77 = scmp.ne.s32.totalorder %s60, %s76
      %p78 = scmp.eq.s32.totalorder %s31, 0
      %p79 = por %p77, %p78
      %s80 = ssub.s32 %s25, %s32
      %p81 = scmp.eq.s32.totalorder %s80, 0
      %s83 = sadd.s32 %s82, 1
      %s84 = scalar_select %p81, %s82, %s83
      %p87 = pneg %p81
      %p88 = scmp.eq.s32.totalorder %s25, 1
      %p89 = por %p87, %p88
      %p90 = scmp.ne.s32.totalorder %s82, %s85
      %p91 = scmp.eq.s32.totalorder %s25, 0
      %p92 = por %p90, %p91
      %p93 = scmp.ne.s32.totalorder %s82, %s85
      %p94 = scmp.eq.s32.totalorder %s30, 1
      %p95 = por %p93, %p94
      %p96 = scmp.ne.s32.totalorder %s85, %s86
      %p97 = scmp.eq.s32.totalorder %s30, 0
      %p98 = por %p96, %p97
      %p99 = scmp.ne.s32.totalorder %s85, %s86
      %p100 = scmp.eq.s32.totalorder %s31, 1
      %p101 = por %p99, %p100
      %p103 = scmp.ne.s32.totalorder %s86, %s102
      %p104 = scmp.eq.s32.totalorder %s31, 0
      %p105 = por %p103, %p104
      %s106 = ssub.s32 %s25, %s32
      %p107 = scmp.eq.s32.totalorder %s106, 0
      %s109 = sadd.s32 %s108, 1
      %s110 = scalar_select %p107, %s108, %s109
      %p113 = pneg %p107
      %p114 = scmp.eq.s32.totalorder %s25, 1
      %p115 = por %p113, %p114
      %p116 = scmp.ne.s32.totalorder %s108, %s111
      %p117 = scmp.eq.s32.totalorder %s25, 0
      %p118 = por %p116, %p117
      %p119 = scmp.ne.s32.totalorder %s108, %s111
      %p120 = scmp.eq.s32.totalorder %s30, 1
      %p121 = por %p119, %p120
      %p122 = scmp.ne.s32.totalorder %s111, %s112
      %p123 = scmp.eq.s32.totalorder %s30, 0
      %p124 = por %p122, %p123
      %p125 = scmp.ne.s32.totalorder %s111, %s112
      %p126 = scmp.eq.s32.totalorder %s31, 1
      %p127 = por %p125, %p126
      %p129 = scmp.ne.s32.totalorder %s112, %s128
      %p130 = scmp.eq.s32.totalorder %s31, 0
      %p131 = por %p129, %p130
      %s133 = sadd.s32 %s132, 1
      %p136 = scmp.eq.s32.totalorder %s25, 1
      %p137 = scmp.ne.s32.totalorder %s132, %s134
      %p138 = scmp.eq.s32.totalorder %s25, 0
      %p139 = por %p137, %p138
      %p140 = scmp.ne.s32.totalorder %s132, %s134
      %p141 = scmp.eq.s32.totalorder %s30, 1
      %p142 = por %p140, %p141
      %p143 = scmp.ne.s32.totalorder %s134, %s135
      %p144 = scmp.eq.s32.totalorder %s30, 0
      %p145 = por %p143, %p144
      %p146 = scmp.ne.s32.totalorder %s134, %s135
      %p147 = scmp.eq.s32.totalorder %s31, 1
      %p148 = por %p146, %p147
      %p150 = scmp.ne.s32.totalorder %s135, %s149
      %p151 = scmp.eq.s32.totalorder %s31, 0
      %p152 = por %p150, %p151
      %s154 = sadd.s32 %s153, 1
      %p157 = scmp.eq.s32.totalorder %s25, 1
      %p158 = scmp.ne.s32.totalorder %s153, %s155
      %p159 = scmp.eq.s32.totalorder %s25, 0
      %p160 = por %p158, %p159
      %p161 = scmp.ne.s32.totalorder %s153, %s155
      %p162 = scmp.eq.s32.totalorder %s30, 1
      %p163 = por %p161, %p162
      %p164 = scmp.ne.s32.totalorder %s155, %s156
      %p165 = scmp.eq.s32.totalorder %s30, 0
      %p166 = por %p164, %p165
      %p167 = scmp.ne.s32.totalorder %s155, %s156
      %p168 = scmp.eq.s32.totalorder %s31, 1
      %p169 = por %p167, %p168
      %p171 = scmp.ne.s32.totalorder %s156, %s170
      %p172 = scmp.eq.s32.totalorder %s31, 0
      %p173 = por %p171, %p172
      %s175 = sadd.s32 %s174, 1
      %p178 = scmp.eq.s32.totalorder %s25, 1
      %p179 = scmp.ne.s32.totalorder %s174, %s176
      %p180 = scmp.eq.s32.totalorder %s25, 0
      %p181 = por %p179, %p180
      %p182 = scmp.ne.s32.totalorder %s174, %s176
      %p183 = scmp.eq.s32.totalorder %s30, 1
      %p184 = por %p182, %p183
      %p185 = scmp.ne.s32.totalorder %s176, %s177
      %p186 = scmp.eq.s32.totalorder %s30, 0
      %p187 = por %p185, %p186
      %p188 = scmp.ne.s32.totalorder %s176, %s177
      %p189 = scmp.eq.s32.totalorder %s31, 1
      %p190 = por %p188, %p189
      %p192 = scmp.ne.s32.totalorder %s177, %s191
      %p193 = scmp.eq.s32.totalorder %s31, 0
      %p194 = por %p192, %p193
      %s196 = sadd.s32 %s195, 1
      %p199 = scmp.eq.s32.totalorder %s25, 1
      %p200 = scmp.ne.s32.totalorder %s195, %s197
      %p201 = scmp.eq.s32.totalorder %s25, 0
      %p202 = por %p200, %p201
      %p203 = scmp.ne.s32.totalorder %s195, %s197
      %p204 = scmp.eq.s32.totalorder %s30, 1
      %p205 = por %p203, %p204
      %p206 = scmp.ne.s32.totalorder %s197, %s198
      %p207 = scmp.eq.s32.totalorder %s30, 0
      %p208 = por %p206, %p207
      %p209 = scmp.ne.s32.totalorder %s197, %s198
      %p210 = scmp.eq.s32.totalorder %s31, 1
      %p211 = por %p209, %p210
      %p213 = scmp.ne.s32.totalorder %s198, %s212
      %p214 = scmp.eq.s32.totalorder %s31, 0
      %p215 = por %p213, %p214
      %s217 = sadd.s32 %s216, 1
      %p220 = scmp.eq.s32.totalorder %s25, 1
      %p221 = scmp.ne.s32.totalorder %s216, %s218
      %p222 = scmp.eq.s32.totalorder %s25, 0
      %p223 = por %p221, %p222
      %p224 = scmp.ne.s32.totalorder %s216, %s218
      %p225 = scmp.eq.s32.totalorder %s30, 1
      %p226 = por %p224, %p225
      %p227 = scmp.ne.s32.totalorder %s218, %s219
      %p228 = scmp.eq.s32.totalorder %s30, 0
      %p229 = por %p227, %p228
      %p230 = scmp.ne.s32.totalorder %s218, %s219
      %p231 = scmp.eq.s32.totalorder %s31, 1
      %p232 = por %p230, %p231
      %p234 = scmp.ne.s32.totalorder %s219, %s233
      %p235 = scmp.eq.s32.totalorder %s31, 0
      %p236 = por %p234, %p235
      %s238 = sadd.s32 %s237, 1
      %p241 = scmp.eq.s32.totalorder %s25, 1
      %p242 = scmp.ne.s32.totalorder %s237, %s239
      %p243 = scmp.eq.s32.totalorder %s25, 0
      %p244 = por %p242, %p243
      %p245 = scmp.ne.s32.totalorder %s237, %s239
      %p246 = scmp.eq.s32.totalorder %s30, 1
      %p247 = por %p245, %p246
      %p248 = scmp.ne.s32.totalorder %s239, %s240
      %p249 = scmp.eq.s32.totalorder %s30, 0
      %p250 = por %p248, %p249
      %p251 = scmp.ne.s32.totalorder %s239, %s240
      %p252 = scmp.eq.s32.totalorder %s31, 1
      %p253 = por %p251, %p252
      %p255 = scmp.ne.s32.totalorder %s240, %s254
      %p256 = scmp.eq.s32.totalorder %s31, 0
      %p257 = por %p255, %p256
      %s259 = sadd.s32 %s258, 1
      %p262 = scmp.eq.s32.totalorder %s25, 1
      %p263 = scmp.ne.s32.totalorder %s258, %s260
      %p264 = scmp.eq.s32.totalorder %s25, 0
      %p265 = por %p263, %p264
      %p266 = scmp.ne.s32.totalorder %s258, %s260
      %p267 = scmp.eq.s32.totalorder %s30, 1
      %p268 = por %p266, %p267
      %p269 = scmp.ne.s32.totalorder %s260, %s261
      %p270 = scmp.eq.s32.totalorder %s30, 0
      %p271 = por %p269, %p270
      %p272 = scmp.ne.s32.totalorder %s260, %s261
      %p273 = scmp.eq.s32.totalorder %s31, 1
      %p274 = por %p272, %p273
      %p276 = scmp.ne.s32.totalorder %s261, %s275
      %p277 = scmp.eq.s32.totalorder %s31, 0
      %p278 = por %p276, %p277
      %s280 = sadd.s32 %s279, 1
      %p283 = scmp.eq.s32.totalorder %s25, 1
      %p284 = scmp.ne.s32.totalorder %s279, %s281
      %p285 = scmp.eq.s32.totalorder %s25, 0
      %p286 = por %p284, %p285
      %p287 = scmp.ne.s32.totalorder %s279, %s281
      %p288 = scmp.eq.s32.totalorder %s30, 1
      %p289 = por %p287, %p288
      %p290 = scmp.ne.s32.totalorder %s281, %s282
      %p291 = scmp.eq.s32.totalorder %s30, 0
      %p292 = por %p290, %p291
      %p293 = scmp.ne.s32.totalorder %s281, %s282
      %p294 = scmp.eq.s32.totalorder %s31, 1
      %p295 = por %p293, %p294
      %p297 = scmp.ne.s32.totalorder %s282, %s296
      %p298 = scmp.eq.s32.totalorder %s31, 0
      %p299 = por %p297, %p298
      %s301 = sadd.s32 %s300, 1
      %p304 = scmp.eq.s32.totalorder %s25, 1
      %p305 = scmp.ne.s32.totalorder %s300, %s302
      %p306 = scmp.eq.s32.totalorder %s25, 0
      %p307 = por %p305, %p306
      %p308 = scmp.ne.s32.totalorder %s300, %s302
      %p309 = scmp.eq.s32.totalorder %s30, 1
      %p310 = por %p308, %p309
      %p311 = scmp.ne.s32.totalorder %s302, %s303
      %p312 = scmp.eq.s32.totalorder %s30, 0
      %p313 = por %p311, %p312
      %p314 = scmp.ne.s32.totalorder %s302, %s303
      %p315 = scmp.eq.s32.totalorder %s31, 1
      %p316 = por %p314, %p315
      %p318 = scmp.ne.s32.totalorder %s303, %s317
      %p319 = scmp.eq.s32.totalorder %s31, 0
      %p320 = por %p318, %p319
      %s322 = sadd.s32 %s321, 1
      %p325 = scmp.eq.s32.totalorder %s25, 1
      %p326 = scmp.ne.s32.totalorder %s321, %s323
      %p327 = scmp.eq.s32.totalorder %s25, 0
      %p328 = por %p326, %p327
      %p329 = scmp.ne.s32.totalorder %s321, %s323
      %p330 = scmp.eq.s32.totalorder %s30, 1
      %p331 = por %p329, %p330
      %p332 = scmp.ne.s32.totalorder %s323, %s324
      %p333 = scmp.eq.s32.totalorder %s30, 0
      %p334 = por %p332, %p333
      %p335 = scmp.ne.s32.totalorder %s323, %s324
      %p336 = scmp.eq.s32.totalorder %s31, 1
      %p337 = por %p335, %p336
      %p339 = scmp.ne.s32.totalorder %s324, %s338
      %p340 = scmp.eq.s32.totalorder %s31, 0
      %p341 = por %p339, %p340
      %s343 = sadd.s32 %s342, 1
      %p346 = scmp.eq.s32.totalorder %s25, 1
      %p347 = scmp.ne.s32.totalorder %s342, %s344
      %p348 = scmp.eq.s32.totalorder %s25, 0
      %p349 = por %p347, %p348
      %p350 = scmp.ne.s32.totalorder %s342, %s344
      %p351 = scmp.eq.s32.totalorder %s30, 1
      %p352 = por %p350, %p351
      %p353 = scmp.ne.s32.totalorder %s344, %s345
      %p354 = scmp.eq.s32.totalorder %s30, 0
      %p355 = por %p353, %p354
      %p356 = scmp.ne.s32.totalorder %s344, %s345
      %p357 = scmp.eq.s32.totalorder %s31, 1
      %p358 = por %p356, %p357
      %p360 = scmp.ne.s32.totalorder %s345, %s359
      %p361 = scmp.eq.s32.totalorder %s31, 0
      %p362 = por %p360, %p361
      %s364 = sadd.s32 %s363, 1
      %p367 = scmp.eq.s32.totalorder %s25, 1
      %p368 = scmp.ne.s32.totalorder %s363, %s365
      %p369 = scmp.eq.s32.totalorder %s25, 0
      %p370 = por %p368, %p369
      %p371 = scmp.ne.s32.totalorder %s363, %s365
      %p372 = scmp.eq.s32.totalorder %s30, 1
      %p373 = por %p371, %p372
      %p374 = scmp.ne.s32.totalorder %s365, %s366
      %p375 = scmp.eq.s32.totalorder %s30, 0
      %p376 = por %p374, %p375
      %p377 = scmp.ne.s32.totalorder %s365, %s366
      %p378 = scmp.eq.s32.totalorder %s31, 1
      %p379 = por %p377, %p378
      %p381 = scmp.ne.s32.totalorder %s366, %s380
      %p382 = scmp.eq.s32.totalorder %s31, 0
      %p383 = por %p381, %p382
      %s385 = sadd.s32 %s384, 1
      %p388 = scmp.eq.s32.totalorder %s25, 1
      %p389 = scmp.ne.s32.totalorder %s384, %s386
      %p390 = scmp.eq.s32.totalorder %s25, 0
      %p391 = por %p389, %p390
      %p392 = scmp.ne.s32.totalorder %s384, %s386
      %p393 = scmp.eq.s32.totalorder %s30, 1
      %p394 = por %p392, %p393
      %p395 = scmp.ne.s32.totalorder %s386, %s387
      %p396 = scmp.eq.s32.totalorder %s30, 0
      %p397 = por %p395, %p396
      %p398 = scmp.ne.s32.totalorder %s386, %s387
      %p399 = scmp.eq.s32.totalorder %s31, 1
      %p400 = por %p398, %p399
      %p402 = scmp.ne.s32.totalorder %s387, %s401
      %p403 = scmp.eq.s32.totalorder %s31, 0
      %p404 = por %p402, %p403
      %s405 = ssub.s32 %s25, %s32
      %p406 = scmp.eq.s32.totalorder %s405, 0
      %s408 = sadd.s32 %s407, 1
      %s409 = scalar_select %p406, %s407, %s408
      %p412 = pneg %p406
      %p413 = scmp.eq.s32.totalorder %s25, 1
      %p414 = por %p412, %p413
      %p415 = scmp.ne.s32.totalorder %s407, %s410
      %p416 = scmp.eq.s32.totalorder %s25, 0
      %p417 = por %p415, %p416
      %p418 = scmp.ne.s32.totalorder %s407, %s410
      %p419 = scmp.eq.s32.totalorder %s30, 1
      %p420 = por %p418, %p419
      %p421 = scmp.ne.s32.totalorder %s410, %s411
      %p422 = scmp.eq.s32.totalorder %s30, 0
      %p423 = por %p421, %p422
      %p424 = scmp.ne.s32.totalorder %s410, %s411
      %p425 = scmp.eq.s32.totalorder %s31, 1
      %p426 = por %p424, %p425
      %p428 = scmp.ne.s32.totalorder %s411, %s427
      %p429 = scmp.eq.s32.totalorder %s31, 0
      %p430 = por %p428, %p429
      %p431 = scmp.le.s32.totalorder 1, %s25
      %p432 = scmp.lt.s32.totalorder %s25, 3
      %p433 = pnand %p431, %p432
      %p434 = pneg %p433
      // Predicated region
      $region9: #{cross_sparse_aggr_forward.1} parent=5 // pred_check
        _
      $region10: #{cross_sparse_aggr_forward.1} parent=5 // pred_check_branch
        %436 = sbr.rel (%p433) target = $region12
      $region11: #{cross_sparse_aggr_forward.1} parent=5 // pred_region
        %s437 = ssub.s32 %s25, 1
        // Predicated region
        $region13: #{cross_sparse_aggr_forward.1} parent=11 // pred_check
          %p438 = pneg %p46
        $region14: #{cross_sparse_aggr_forward.1} parent=11 // pred_check_branch
          %440 = sbr.rel (%p438) target = $region16
        $region15: #{cross_sparse_aggr_forward.1} parent=11 // pred_region
          _
        $region16: #{cross_sparse_aggr_forward.1} parent=11 // pred_fallthru
          _
        // Predicated region
        $region17: #{cross_sparse_aggr_forward.1} parent=11 // pred_check
          %p441 = pneg %p145
        $region18: #{cross_sparse_aggr_forward.1} parent=11 // pred_check_branch
          %443 = sbr.rel (%p441) target = $region20
        $region19: #{cross_sparse_aggr_forward.1} parent=11 // pred_region
          %s445 = ssub.s32 16, 16
          %446 = vsyncadd [#allocation3], %s445
          %s448 = sshll.u32 %s4, 4
          %s449 = int_to_ptr.vmem [resolvable:$true] %s448
          %451 = dma.vmem_to_smem %s449, 16, [#allocation2], [#allocation3]
        $region20: #{cross_sparse_aggr_forward.1} parent=11 // pred_fallthru
          _
        // Predicated region
        $region21: #{cross_sparse_aggr_forward.1} parent=11 // pred_check
          %p452 = pneg %p166
        $region22: #{cross_sparse_aggr_forward.1} parent=11 // pred_check_branch
          %454 = sbr.rel (%p452) target = $region24
        $region23: #{cross_sparse_aggr_forward.1} parent=11 // pred_region
          %s456 = ssub.s32 16, 16
          %457 = vsyncadd [#allocation5], %s456
          %s459 = sshll.u32 %s5, 4
          %s460 = int_to_ptr.vmem [resolvable:$true] %s459
          %462 = dma.vmem_to_smem %s460, 16, [#allocation4], [#allocation5]
        $region24: #{cross_sparse_aggr_forward.1} parent=11 // pred_fallthru
          _
        // Predicated region
        $region25: #{cross_sparse_aggr_forward.1} parent=11 // pred_check
          %p463 = pneg %p187
        $region26: #{cross_sparse_aggr_forward.1} parent=11 // pred_check_branch
          %465 = sbr.rel (%p463) target = $region28
        $region27: #{cross_sparse_aggr_forward.1} parent=11 // pred_region
          %s467 = ssub.s32 16, 16
          %468 = vsyncadd [#allocation5], %s467
          %s470 = sshll.u32 %s6, 4
          %s471 = int_to_ptr.vmem [resolvable:$true] %s470
          %473 = dma.vmem_to_smem %s471, 16, [#allocation6], [#allocation5]
        $region28: #{cross_sparse_aggr_forward.1} parent=11 // pred_fallthru
          _
        // Predicated region
        $region29: #{cross_sparse_aggr_forward.1} parent=11 // pred_check
          %p474 = pneg %p208
        $region30: #{cross_sparse_aggr_forward.1} parent=11 // pred_check_branch
          %476 = sbr.rel (%p474) target = $region32
        $region31: #{cross_sparse_aggr_forward.1} parent=11 // pred_region
          _
        $region32: #{cross_sparse_aggr_forward.1} parent=11 // pred_fallthru
          _
        // Predicated region
        $region33: #{cross_sparse_aggr_forward.1} parent=11 // pred_check
          %p477 = pneg %p229
        $region34: #{cross_sparse_aggr_forward.1} parent=11 // pred_check_branch
          %479 = sbr.rel (%p477) target = $region36
        $region35: #{cross_sparse_aggr_forward.1} parent=11 // pred_region
          _
        $region36: #{cross_sparse_aggr_forward.1} parent=11 // pred_fallthru
          _
        // Predicated region
        $region37: #{cross_sparse_aggr_forward.1} parent=11 // pred_check
          %p480 = pneg %p250
        $region38: #{cross_sparse_aggr_forward.1} parent=11 // pred_check_branch
          %482 = sbr.rel (%p480) target = $region40
        $region39: #{cross_sparse_aggr_forward.1} parent=11 // pred_region
          _
        $region40: #{cross_sparse_aggr_forward.1} parent=11 // pred_fallthru
          _
        // Predicated region
        $region41: #{cross_sparse_aggr_forward.1} parent=11 // pred_check
          %p483 = pneg %p271
        $region42: #{cross_sparse_aggr_forward.1} parent=11 // pred_check_branch
          %485 = sbr.rel (%p483) target = $region44
        $region43: #{cross_sparse_aggr_forward.1} parent=11 // pred_region
          _
        $region44: #{cross_sparse_aggr_forward.1} parent=11 // pred_fallthru
          _
        // Predicated region
        $region45: #{cross_sparse_aggr_forward.1} parent=11 // pred_check
          %p486 = pneg %p292
        $region46: #{cross_sparse_aggr_forward.1} parent=11 // pred_check_branch
          %488 = sbr.rel (%p486) target = $region48
        $region47: #{cross_sparse_aggr_forward.1} parent=11 // pred_region
          _
        $region48: #{cross_sparse_aggr_forward.1} parent=11 // pred_fallthru
          _
        // Predicated region
        $region49: #{cross_sparse_aggr_forward.1} parent=11 // pred_check
          %p489 = pneg %p313
        $region50: #{cross_sparse_aggr_forward.1} parent=11 // pred_check_branch
          %491 = sbr.rel (%p489) target = $region52
        $region51: #{cross_sparse_aggr_forward.1} parent=11 // pred_region
          _
        $region52: #{cross_sparse_aggr_forward.1} parent=11 // pred_fallthru
          _
        // Predicated region
        $region53: #{cross_sparse_aggr_forward.1} parent=11 // pred_check
          %p492 = pneg %p334
        $region54: #{cross_sparse_aggr_forward.1} parent=11 // pred_check_branch
          %494 = sbr.rel (%p492) target = $region56
        $region55: #{cross_sparse_aggr_forward.1} parent=11 // pred_region
          _
        $region56: #{cross_sparse_aggr_forward.1} parent=11 // pred_fallthru
          _
        // Predicated region
        $region57: #{cross_sparse_aggr_forward.1} parent=11 // pred_check
          %p495 = pneg %p355
        $region58: #{cross_sparse_aggr_forward.1} parent=11 // pred_check_branch
          %497 = sbr.rel (%p495) target = $region60
        $region59: #{cross_sparse_aggr_forward.1} parent=11 // pred_region
          _
        $region60: #{cross_sparse_aggr_forward.1} parent=11 // pred_fallthru
          _
        // Predicated region
        $region61: #{cross_sparse_aggr_forward.1} parent=11 // pred_check
          %p498 = pneg %p376
        $region62: #{cross_sparse_aggr_forward.1} parent=11 // pred_check_branch
          %500 = sbr.rel (%p498) target = $region64
        $region63: #{cross_sparse_aggr_forward.1} parent=11 // pred_region
          _
        $region64: #{cross_sparse_aggr_forward.1} parent=11 // pred_fallthru
          _
        // Predicated region
        $region65: #{cross_sparse_aggr_forward.1} parent=11 // pred_check
          %p501 = pneg %p397
        $region66: #{cross_sparse_aggr_forward.1} parent=11 // pred_check_branch
          %503 = sbr.rel (%p501) target = $region68
        $region67: #{cross_sparse_aggr_forward.1} parent=11 // pred_region
          _
        $region68: #{cross_sparse_aggr_forward.1} parent=11 // pred_fallthru
          _
      $region12: #{cross_sparse_aggr_forward.1} parent=5 // pred_fallthru
        _
      %p504 = scmp.lt.s32.totalorder %s25, 2
      // Predicated region
      $region69: #{cross_sparse_aggr_forward.1} parent=5 // pred_check
        %p505 = pneg %p504
      $region70: #{cross_sparse_aggr_forward.1} parent=5 // pred_check_branch
        %507 = sbr.rel (%p505) target = $region72
      $region71: #{cross_sparse_aggr_forward.1} parent=5 // pred_region
        // Predicated region
        $region73: #{cross_sparse_aggr_forward.1} parent=71 // pred_check
          %p508 = pneg %p66
        $region74: #{cross_sparse_aggr_forward.1} parent=71 // pred_check_branch
          %510 = sbr.rel (%p508) target = $region76
        $region75: #{cross_sparse_aggr_forward.1} parent=71 // pred_region
          %p511 = scmp.lt.s32.totalorder %s25, 1
          %s512 = scalar_select %p511, %s25, 1
          %s513 = smul.addr %s512, 8
          %s514 = scalar_lea.vmem %s1, %s513
        $region76: #{cross_sparse_aggr_forward.1} parent=71 // pred_fallthru
          _
        // Predicated region
        $region77: #{cross_sparse_aggr_forward.1} parent=71 // pred_check
          %p515 = pneg %p92
        $region78: #{cross_sparse_aggr_forward.1} parent=71 // pred_check_branch
          %517 = sbr.rel (%p515) target = $region80
        $region79: #{cross_sparse_aggr_forward.1} parent=71 // pred_region
          %p518 = scmp.lt.s32.totalorder %s25, 1
          %s519 = scalar_select %p518, %s25, 1
          %s520 = smul.addr %s519, 2
          %s521 = scalar_lea.vmem %s2, %s520
        $region80: #{cross_sparse_aggr_forward.1} parent=71 // pred_fallthru
          _
        // Predicated region
        $region81: #{cross_sparse_aggr_forward.1} parent=71 // pred_check
          %p522 = pneg %p118
        $region82: #{cross_sparse_aggr_forward.1} parent=71 // pred_check_branch
          %524 = sbr.rel (%p522) target = $region84
        $region83: #{cross_sparse_aggr_forward.1} parent=71 // pred_region
          %p525 = scmp.lt.s32.totalorder %s25, 1
          %s526 = scalar_select %p525, %s25, 1
          %s527 = smul.addr %s526, 2
          %s528 = scalar_lea.vmem %s3, %s527
        $region84: #{cross_sparse_aggr_forward.1} parent=71 // pred_fallthru
          _
      $region72: #{cross_sparse_aggr_forward.1} parent=5 // pred_fallthru
        _
      %p529 = scmp.le.s32.totalorder 1, %s25
      %p530 = scmp.lt.s32.totalorder %s25, 3
      %p531 = pnand %p529, %p530
      %p532 = pneg %p531
      // Predicated region
      $region85: #{cross_sparse_aggr_forward.1} parent=5 // pred_check
        _
      $region86: #{cross_sparse_aggr_forward.1} parent=5 // pred_check_branch
        %534 = sbr.rel (%p531) target = $region88
      $region87: #{cross_sparse_aggr_forward.1} parent=5 // pred_region
        %s535 = ssub.s32 %s25, 1
        // Predicated region
        $region89: #{cross_sparse_aggr_forward.1} parent=87 // pred_check
          %p536 = pneg %p145
        $region90: #{cross_sparse_aggr_forward.1} parent=87 // pred_check_branch
          %538 = sbr.rel (%p536) target = $region92
        $region91: #{cross_sparse_aggr_forward.1} parent=87 // pred_region
          %539 = dma.done [#allocation3], 16
        $region92: #{cross_sparse_aggr_forward.1} parent=87 // pred_fallthru
          _
        // Predicated region
        $region93: #{cross_sparse_aggr_forward.1} parent=87 // pred_check
          %p540 = pneg %p166
        $region94: #{cross_sparse_aggr_forward.1} parent=87 // pred_check_branch
          %542 = sbr.rel (%p540) target = $region96
        $region95: #{cross_sparse_aggr_forward.1} parent=87 // pred_region
          %543 = dma.done [#allocation5], 16
        $region96: #{cross_sparse_aggr_forward.1} parent=87 // pred_fallthru
          _
        // Predicated region
        $region97: #{cross_sparse_aggr_forward.1} parent=87 // pred_check
          %p544 = pneg %p187
        $region98: #{cross_sparse_aggr_forward.1} parent=87 // pred_check_branch
          %546 = sbr.rel (%p544) target = $region100
        $region99: #{cross_sparse_aggr_forward.1} parent=87 // pred_region
          %547 = dma.done [#allocation5], 16
        $region100: #{cross_sparse_aggr_forward.1} parent=87 // pred_fallthru
          _
        %548 = sfence
        %p549 = pneg %p46
        %p550 = pneg %p43
        %p551 = scmp.lt.s32.totalorder %s30, 1
        %s552 = scalar_select %p551, %s30, 1
        %s553 = smul.addr %s552, 8
        %s554 = scalar_lea.vmem %s1, %s553
        %p555 = pneg %p72
        %p556 = pneg %p69
        %p557 = scmp.lt.s32.totalorder %s30, 1
        %s558 = scalar_select %p557, %s30, 1
        %s559 = smul.addr %s558, 2
        %s560 = scalar_lea.vmem %s2, %s559
        %p561 = pneg %p98
        %p562 = pneg %p95
        %p563 = scmp.lt.s32.totalorder %s30, 1
        %s564 = scalar_select %p563, %s30, 1
        %s565 = smul.addr %s564, 2
        %s566 = scalar_lea.vmem %s3, %s565
        %p567 = pneg %p124
        %p568 = pneg %p121
        %p569 = pneg %p145
        %p570 = pneg %p142
        %p571 = pneg %p166
        %p572 = pneg %p163
        %p573 = pneg %p187
        %p574 = pneg %p184
        %p575 = pneg %p208
        %p576 = pneg %p205
        %p577 = pneg %p229
        %p578 = pneg %p226
        %p579 = pneg %p250
        %p580 = pneg %p247
        %p581 = pneg %p271
        %p582 = pneg %p268
        %p583 = pneg %p292
        %p584 = pneg %p289
        %p585 = pneg %p313
        %p586 = pneg %p310
        %p587 = pneg %p334
        %p588 = pneg %p331
        %p589 = pneg %p355
        %p590 = pneg %p352
        %p591 = pneg %p376
        %p592 = pneg %p373
        %p593 = pneg %p397
        %p594 = pneg %p394
        %p595 = pneg %p423
        %p596 = pneg %p420
        %p597 = scmp.lt.s32.totalorder %s30, 1
        %s598 = scalar_select %p597, %s30, 1
        %s599 = scalar_lea.vmem %s17, %s598
        %p600 = scmp.lt.s32.totalorder %s30, 1
        %s601 = scalar_select %p600, %s30, 1
        %s602 = smul.addr %s601, 8
        %s603 = scalar_lea.vmem %s1, %s602
        %p604 = scmp.lt.s32.totalorder %s30, 1
        %s605 = scalar_select %p604, %s30, 1
        %s606 = smul.addr %s605, 2
        %s607 = scalar_lea.vmem %s2, %s606
        %p608 = scmp.lt.s32.totalorder %s30, 1
        %s609 = scalar_select %p608, %s30, 1
        %s610 = smul.addr %s609, 2
        %s611 = scalar_lea.vmem %s3, %s610
        %p612 = scmp.lt.s32.totalorder %s30, 1
        %s613 = scalar_select %p612, %s30, 1
        %s614 = scalar_lea.vmem %s17, %s613
        %s615 = sld [smem:[#allocation6]]
        %s616 = sld [smem:[#allocation6 + $0x1]]
        %s617 = sld [smem:[#allocation2 + %s30]]
        %s618 = sld [smem:[#allocation4 + %s30]]
        %v619 = vld [vmem:[%s0] sm:$0xff]
        %v620 = vld [vmem:[%s0 + $0x8] sm:$0xff]
        %v621 = vld [vmem:[%s0 + $0x10] sm:$0xff]
        %v622 = vld [vmem:[%s0 + $0x18] sm:$0xff]
        %v623 = vld [vmem:[%s603] sm:$0xff]
        %v624 = vld [vmem:[%s607] sm:$0x3]
        %v625 = vld [vmem:[%s611] sm:$0x3]
        %v626 = vld [vmem:[%s13] sm:$0xff]
        %v627 = vld [vmem:[%s13 + $0x8] sm:$0xff]
        %v628 = vld [vmem:[%s13 + $0x10] sm:$0xff]
        %v629 = vld [vmem:[%s13 + $0x18] sm:$0xff]
        %v630 = vld [vmem:[%s14] sm:$0x1]
        %v632 = vlaneseq
        %v633 = vshrl.u32 %v632, 7
        %v634 = vsub.s32 0, %v633
        %v635 = vrot.slane %v630, %v634
        %vm637 = vcmask 261120
        %v639 = vsel %vm637, %v623, 0
        %641 = vmatprep.subr.mxu0 0.0
        %642 = vmatpush1.msra.mxu0 0.0
        %643 = vmatprep.subr.mxu0 0.0
        %644 = vmatpush1.msra.mxu0 0.0
        %645 = vmatprep.subr.mxu0 0.0
        %646 = vmatpush1.msra.mxu0 0.0
        %647 = vmatprep.subr.mxu0 0.0
        %648 = vmatpush1.msra.mxu0 0.0
        %649 = vmatprep.subr.mxu0 0.0
        %650 = vmatpush1.msra.mxu0 0.0
        %651 = vmatprep.subr.mxu0 0.0
        %652 = vmatpush1.msra.mxu0 0.0
        %653 = vmatprep.subr.mxu0 0.0
        %654 = vmatpush1.msra.mxu0 0.0
        %655 = vmatprep.subr.mxu0 0.0
        %656 = vmatpush1.msra.mxu0 0.0
        %657 = vmatprep.subr.mxu0 0.0
        %658 = vmatpush1.msra.mxu0 0.0
        %659 = vmatprep.subr.mxu0 0.0
        %660 = vmatpush1.msra.mxu0 0.0
        %661 = vmatprep.subr.mxu0 0.0
        %662 = vmatpush1.msra.mxu0 0.0
        %663 = vmatprep.subr.mxu0 0.0
        %664 = vmatpush1.msra.mxu0 0.0
        %665 = vmatprep.subr.mxu0 0.0
        %666 = vmatpush1.msra.mxu0 %v629
        %667 = vmatprep.subr.mxu0 0.0
        %668 = vmatpush1.msra.mxu0 %v628
        %669 = vmatprep.subr.mxu0 0.0
        %670 = vmatpush1.msra.mxu0 %v627
        %671 = vmatprep.subr.mxu0 0.0
        %672 = vmatpush1.msra.mxu0 %v626
        %673 = vmatprep.subr.mxu0 0.0
        %674 = vmatpush2.msra.mxu0 0.0
        %675 = vmatprep.subr.mxu0 0.0
        %676 = vmatpush2.msra.mxu0 0.0
        %677 = vmatprep.subr.mxu0 0.0
        %678 = vmatpush2.msra.mxu0 0.0
        %679 = vmatprep.subr.mxu0 0.0
        %680 = vmatpush2.msra.mxu0 0.0
        %681 = vmatprep.subr.mxu0 0.0
        %682 = vmatpush2.msra.mxu0 0.0
        %683 = vmatprep.subr.mxu0 0.0
        %684 = vmatpush2.msra.mxu0 0.0
        %685 = vmatprep.subr.mxu0 0.0
        %686 = vmatpush2.msra.mxu0 0.0
        %687 = vmatprep.subr.mxu0 0.0
        %688 = vmatpush2.msra.mxu0 0.0
        %689 = vmatprep.subr.mxu0 0.0
        %690 = vmatpush2.msra.mxu0 0.0
        %691 = vmatprep.subr.mxu0 0.0
        %692 = vmatpush2.msra.mxu0 0.0
        %693 = vmatprep.subr.mxu0 0.0
        %694 = vmatpush2.msra.mxu0 0.0
        %695 = vmatprep.subr.mxu0 0.0
        %696 = vmatpush2.msra.mxu0 0.0
        %697 = vmatprep.subr.mxu0 0.0
        %698 = vmatpush2.msra.mxu0 0.0
        %699 = vmatprep.subr.mxu0 0.0
        %700 = vmatpush2.msra.mxu0 0.0
        %701 = vmatprep.subr.mxu0 0.0
        %702 = vmatpush2.msra.mxu0 0.0
        %703 = vmatprep.subr.mxu0 0.0
        %704 = vmatpush2.msra.mxu0 0.0
        %705 = vmatprep.mubr.f32.mxu0 0.0
        %706 = vmatmul.mubr.f32.gmra.mxu0 %v639
        %v707 = vpop.f32.mrf.mxu0
        %v708 = vadd.f32 %v635, %v707
        %v709 = vpop.f32.mrf.mxu0
        %710 = vdwg.mxu0
        %v711 = vld [vmem:[%s15] sm:$0xff]
        %v712 = vld [vmem:[%s15 + $0x8] sm:$0xff]
        %v713 = vld [vmem:[%s15 + $0x10] sm:$0xff]
        %v714 = vld [vmem:[%s15 + $0x18] sm:$0xff]
        %v715 = vld [vmem:[%s16] sm:$0x1]
        %v717 = vlaneseq
        %v718 = vshrl.u32 %v717, 7
        %v719 = vsub.s32 0, %v718
        %v720 = vrot.slane %v715, %v719
        %722 = vmatprep.subr.mxu0 0.0
        %723 = vmatpush1.msra.mxu0 0.0
        %724 = vmatprep.subr.mxu0 0.0
        %725 = vmatpush1.msra.mxu0 0.0
        %726 = vmatprep.subr.mxu0 0.0
        %727 = vmatpush1.msra.mxu0 0.0
        %728 = vmatprep.subr.mxu0 0.0
        %729 = vmatpush1.msra.mxu0 0.0
        %730 = vmatprep.subr.mxu0 0.0
        %731 = vmatpush1.msra.mxu0 0.0
        %732 = vmatprep.subr.mxu0 0.0
        %733 = vmatpush1.msra.mxu0 0.0
        %734 = vmatprep.subr.mxu0 0.0
        %735 = vmatpush1.msra.mxu0 0.0
        %736 = vmatprep.subr.mxu0 0.0
        %737 = vmatpush1.msra.mxu0 0.0
        %738 = vmatprep.subr.mxu0 0.0
        %739 = vmatpush1.msra.mxu0 0.0
        %740 = vmatprep.subr.mxu0 0.0
        %741 = vmatpush1.msra.mxu0 0.0
        %742 = vmatprep.subr.mxu0 0.0
        %743 = vmatpush1.msra.mxu0 0.0
        %744 = vmatprep.subr.mxu0 0.0
        %745 = vmatpush1.msra.mxu0 0.0
        %746 = vmatprep.subr.mxu0 0.0
        %747 = vmatpush1.msra.mxu0 %v714
        %748 = vmatprep.subr.mxu0 0.0
        %749 = vmatpush1.msra.mxu0 %v713
        %750 = vmatprep.subr.mxu0 0.0
        %751 = vmatpush1.msra.mxu0 %v712
        %752 = vmatprep.subr.mxu0 0.0
        %753 = vmatpush1.msra.mxu0 %v711
        %754 = vmatprep.subr.mxu0 0.0
        %755 = vmatpush2.msra.mxu0 0.0
        %756 = vmatprep.subr.mxu0 0.0
        %757 = vmatpush2.msra.mxu0 0.0
        %758 = vmatprep.subr.mxu0 0.0
        %759 = vmatpush2.msra.mxu0 0.0
        %760 = vmatprep.subr.mxu0 0.0
        %761 = vmatpush2.msra.mxu0 0.0
        %762 = vmatprep.subr.mxu0 0.0
        %763 = vmatpush2.msra.mxu0 0.0
        %764 = vmatprep.subr.mxu0 0.0
        %765 = vmatpush2.msra.mxu0 0.0
        %766 = vmatprep.subr.mxu0 0.0
        %767 = vmatpush2.msra.mxu0 0.0
        %768 = vmatprep.subr.mxu0 0.0
        %769 = vmatpush2.msra.mxu0 0.0
        %770 = vmatprep.subr.mxu0 0.0
        %771 = vmatpush2.msra.mxu0 0.0
        %772 = vmatprep.subr.mxu0 0.0
        %773 = vmatpush2.msra.mxu0 0.0
        %774 = vmatprep.subr.mxu0 0.0
        %775 = vmatpush2.msra.mxu0 0.0
        %776 = vmatprep.subr.mxu0 0.0
        %777 = vmatpush2.msra.mxu0 0.0
        %778 = vmatprep.subr.mxu0 0.0
        %779 = vmatpush2.msra.mxu0 0.0
        %780 = vmatprep.subr.mxu0 0.0
        %781 = vmatpush2.msra.mxu0 0.0
        %782 = vmatprep.subr.mxu0 0.0
        %783 = vmatpush2.msra.mxu0 0.0
        %784 = vmatprep.subr.mxu0 0.0
        %785 = vmatpush2.msra.mxu0 0.0
        %786 = vmatprep.mubr.f32.mxu0 0.0
        %787 = vmatmul.mubr.f32.gmra.mxu0 %v639
        %v788 = vpop.f32.mrf.mxu0
        %v789 = vadd.f32 %v720, %v788
        %v790 = vpop.f32.mrf.mxu0
        %791 = vdwg.mxu0
        %v792 = vlaneseq
        %v793 = vshrl.u32 %v792, 7
        %v794 = vstv %s617
        %vm795 = vcmp.lt.s32.totalorder %v793, %v794
        %v796 = vsel %vm795, 1, 0
        %v797 = vcvt.s32.f32 %v796
        %v798 = vlaneseq
        %v799 = vshrl.u32 %v798, 7
        %v800 = vsub.s32 0, %v799
        %v801 = vrot.slane %v624, %v800
        %803 = vbcast.lane.b32.xlu0 %v801, 256
        %v804 = vpop.permute.xlu0 %803
        %v805 = vlaneseq
        %v806 = vshrl.u32 %v805, 7
        %v807 = vsub.s32 1, %v806
        %v808 = vrot.slane %v624, %v807
        %810 = vbcast.lane.b32.xlu0 %v808, 256
        %v811 = vpop.permute.xlu0 %810
        %v812 = vlaneseq
        %v813 = vand.u32 %v812, 127
        %vm814 = vcmp.eq.s32.totalorder %v804, %v813
        %vm815 = vcmp.eq.s32.totalorder %v811, %v813
        %v816 = vsel %vm814, 1, 0
        %v817 = vsel %vm815, 1, 0
        %v818 = vcvt.s32.f32 %v816
        %v819 = vcvt.s32.f32 %v817
        %vm820 = vcmask 130048
        %v822 = vsel %vm820, %v818, 0
        %824 = vmatprep.subr.mxu0 0.0
        %825 = vmatpush1.msra.mxu0 0.0
        %826 = vmatprep.subr.mxu0 0.0
        %827 = vmatpush1.msra.mxu0 0.0
        %828 = vmatprep.subr.mxu0 0.0
        %829 = vmatpush1.msra.mxu0 0.0
        %830 = vmatprep.subr.mxu0 0.0
        %831 = vmatpush1.msra.mxu0 0.0
        %832 = vmatprep.subr.mxu0 0.0
        %833 = vmatpush1.msra.mxu0 0.0
        %834 = vmatprep.subr.mxu0 0.0
        %835 = vmatpush1.msra.mxu0 0.0
        %836 = vmatprep.subr.mxu0 0.0
        %837 = vmatpush1.msra.mxu0 0.0
        %838 = vmatprep.subr.mxu0 0.0
        %839 = vmatpush1.msra.mxu0 0.0
        %840 = vmatprep.subr.mxu0 0.0
        %841 = vmatpush1.msra.mxu0 0.0
        %842 = vmatprep.subr.mxu0 0.0
        %843 = vmatpush1.msra.mxu0 0.0
        %844 = vmatprep.subr.mxu0 0.0
        %845 = vmatpush1.msra.mxu0 0.0
        %846 = vmatprep.subr.mxu0 0.0
        %847 = vmatpush1.msra.mxu0 0.0
        %848 = vmatprep.subr.mxu0 0.0
        %849 = vmatpush1.msra.mxu0 0.0
        %850 = vmatprep.subr.mxu0 0.0
        %851 = vmatpush1.msra.mxu0 0.0
        %852 = vmatprep.subr.mxu0 0.0
        %853 = vmatpush1.msra.mxu0 %v620
        %854 = vmatprep.subr.mxu0 0.0
        %855 = vmatpush1.msra.mxu0 %v619
        %856 = vmatprep.subr.mxu0 0.0
        %857 = vmatpush2.msra.mxu0 0.0
        %858 = vmatprep.subr.mxu0 0.0
        %859 = vmatpush2.msra.mxu0 0.0
        %860 = vmatprep.subr.mxu0 0.0
        %861 = vmatpush2.msra.mxu0 0.0
        %862 = vmatprep.subr.mxu0 0.0
        %863 = vmatpush2.msra.mxu0 0.0
        %864 = vmatprep.subr.mxu0 0.0
        %865 = vmatpush2.msra.mxu0 0.0
        %866 = vmatprep.subr.mxu0 0.0
        %867 = vmatpush2.msra.mxu0 0.0
        %868 = vmatprep.subr.mxu0 0.0
        %869 = vmatpush2.msra.mxu0 0.0
        %870 = vmatprep.subr.mxu0 0.0
        %871 = vmatpush2.msra.mxu0 0.0
        %872 = vmatprep.subr.mxu0 0.0
        %873 = vmatpush2.msra.mxu0 0.0
        %874 = vmatprep.subr.mxu0 0.0
        %875 = vmatpush2.msra.mxu0 0.0
        %876 = vmatprep.subr.mxu0 0.0
        %877 = vmatpush2.msra.mxu0 0.0
        %878 = vmatprep.subr.mxu0 0.0
        %879 = vmatpush2.msra.mxu0 0.0
        %880 = vmatprep.subr.mxu0 0.0
        %881 = vmatpush2.msra.mxu0 0.0
        %882 = vmatprep.subr.mxu0 0.0
        %883 = vmatpush2.msra.mxu0 0.0
        %884 = vmatprep.subr.mxu0 0.0
        %885 = vmatpush2.msra.mxu0 0.0
        %886 = vmatprep.subr.mxu0 0.0
        %887 = vmatpush2.msra.mxu0 0.0
        %888 = vmatprep.mubr.f32.mxu0 0.0
        %889 = vmatmul.mubr.f32.gmra.mxu0 %v822
        %v890 = vpop.f32.mrf.mxu0
        %v891 = vadd.f32 0.0, %v890
        %v892 = vpop.f32.mrf.mxu0
        %893 = vdwg.mxu0
        %v895 = vsel %vm820, %v819, 0
        %897 = vmatprep.subr.mxu0 0.0
        %898 = vmatpush1.msra.mxu0 0.0
        %899 = vmatprep.subr.mxu0 0.0
        %900 = vmatpush1.msra.mxu0 0.0
        %901 = vmatprep.subr.mxu0 0.0
        %902 = vmatpush1.msra.mxu0 0.0
        %903 = vmatprep.subr.mxu0 0.0
        %904 = vmatpush1.msra.mxu0 0.0
        %905 = vmatprep.subr.mxu0 0.0
        %906 = vmatpush1.msra.mxu0 0.0
        %907 = vmatprep.subr.mxu0 0.0
        %908 = vmatpush1.msra.mxu0 0.0
        %909 = vmatprep.subr.mxu0 0.0
        %910 = vmatpush1.msra.mxu0 0.0
        %911 = vmatprep.subr.mxu0 0.0
        %912 = vmatpush1.msra.mxu0 0.0
        %913 = vmatprep.subr.mxu0 0.0
        %914 = vmatpush1.msra.mxu0 0.0
        %915 = vmatprep.subr.mxu0 0.0
        %916 = vmatpush1.msra.mxu0 0.0
        %917 = vmatprep.subr.mxu0 0.0
        %918 = vmatpush1.msra.mxu0 0.0
        %919 = vmatprep.subr.mxu0 0.0
        %920 = vmatpush1.msra.mxu0 0.0
        %921 = vmatprep.subr.mxu0 0.0
        %922 = vmatpush1.msra.mxu0 0.0
        %923 = vmatprep.subr.mxu0 0.0
        %924 = vmatpush1.msra.mxu0 0.0
        %925 = vmatprep.subr.mxu0 0.0
        %926 = vmatpush1.msra.mxu0 %v622
        %927 = vmatprep.subr.mxu0 0.0
        %928 = vmatpush1.msra.mxu0 %v621
        %929 = vmatprep.subr.mxu0 0.0
        %930 = vmatpush2.msra.mxu0 0.0
        %931 = vmatprep.subr.mxu0 0.0
        %932 = vmatpush2.msra.mxu0 0.0
        %933 = vmatprep.subr.mxu0 0.0
        %934 = vmatpush2.msra.mxu0 0.0
        %935 = vmatprep.subr.mxu0 0.0
        %936 = vmatpush2.msra.mxu0 0.0
        %937 = vmatprep.subr.mxu0 0.0
        %938 = vmatpush2.msra.mxu0 0.0
        %939 = vmatprep.subr.mxu0 0.0
        %940 = vmatpush2.msra.mxu0 0.0
        %941 = vmatprep.subr.mxu0 0.0
        %942 = vmatpush2.msra.mxu0 0.0
        %943 = vmatprep.subr.mxu0 0.0
        %944 = vmatpush2.msra.mxu0 0.0
        %945 = vmatprep.subr.mxu0 0.0
        %946 = vmatpush2.msra.mxu0 0.0
        %947 = vmatprep.subr.mxu0 0.0
        %948 = vmatpush2.msra.mxu0 0.0
        %949 = vmatprep.subr.mxu0 0.0
        %950 = vmatpush2.msra.mxu0 0.0
        %951 = vmatprep.subr.mxu0 0.0
        %952 = vmatpush2.msra.mxu0 0.0
        %953 = vmatprep.subr.mxu0 0.0
        %954 = vmatpush2.msra.mxu0 0.0
        %955 = vmatprep.subr.mxu0 0.0
        %956 = vmatpush2.msra.mxu0 0.0
        %957 = vmatprep.subr.mxu0 0.0
        %958 = vmatpush2.msra.mxu0 0.0
        %959 = vmatprep.subr.mxu0 0.0
        %960 = vmatpush2.msra.mxu0 0.0
        %961 = vmatprep.mubr.f32.mxu0 0.0
        %962 = vmatmul.mubr.f32.gmra.mxu0 %v895
        %v963 = vpop.f32.mrf.mxu0
        %v964 = vadd.f32 0.0, %v963
        %v965 = vpop.f32.mrf.mxu0
        %966 = vdwg.mxu0
        %v967 = vlaneseq
        %v968 = vshrl.u32 %v967, 7
        %v969 = vsub.s32 0, %v968
        %v970 = vrot.slane %v625, %v969
        %972 = vbcast.lane.b32.xlu0 %v970, 256
        %v973 = vpop.permute.xlu0 %972
        %s975 = sor.u32 256, 8
        %976 = vbcast.lane.b32.xlu0 %v970, %s975
        %v977 = vpop.permute.xlu0 %976
        %v978 = vlaneseq
        %v979 = vshrl.u32 %v978, 7
        %v980 = vsub.s32 1, %v979
        %v981 = vrot.slane %v625, %v980
        %983 = vbcast.lane.b32.xlu0 %v981, 256
        %v984 = vpop.permute.xlu0 %983
        %s986 = sor.u32 256, 8
        %987 = vbcast.lane.b32.xlu0 %v981, %s986
        %v988 = vpop.permute.xlu0 %987
        %v989 = vmul.f32 %v973, %v619
        %v990 = vmul.f32 %v977, %v620
        %v991 = vmul.f32 %v984, %v621
        %v992 = vmul.f32 %v988, %v622
        %v993 = vsel %vm637, %v989, 0.0
        %v994 = vsel %vm637, %v990, 0.0
        %v995 = vadd.f32 %v993, %v994
        %v996 = vrot.slane %v995, 4
        %v997 = vadd.f32 %v995, %v996
        %v998 = vrot.slane %v997, 2
        %v999 = vadd.f32 %v997, %v998
        %v1000 = vrot.slane %v999, 1
        %v1001 = vadd.f32 %v999, %v1000
        %v1002 = vsel %vm637, %v991, 0.0
        %v1003 = vsel %vm637, %v992, 0.0
        %v1004 = vadd.f32 %v1002, %v1003
        %v1005 = vrot.slane %v1004, 4
        %v1006 = vadd.f32 %v1004, %v1005
        %v1007 = vrot.slane %v1006, 2
        %v1008 = vadd.f32 %v1006, %v1007
        %v1009 = vrot.slane %v1008, 1
        %v1010 = vadd.f32 %v1008, %v1009
        %v1011 = vsel %vm637, %v891, 0.0
        %1012 = vadd.xlane.f32.xlu0 %v1011
        %v1013 = vpop.xlane.xlu0 %1012
        %v1014 = vsel %vm637, %v964, 0.0
        %1015 = vadd.xlane.f32.xlu0 %v1014
        %v1016 = vpop.xlane.xlu0 %1015
        %v1017 = vrcp.pop 32.0
        %v1018 = vmul.f32 %v1013, %v1017
        %v1019 = vmul.f32 %v1016, %v1017
        %v1020 = vsub.f32 %v891, %v1018
        %v1021 = vsub.f32 %v964, %v1019
        %v1022 = vmul.f32 %v1020, %v1020
        %v1023 = vmul.f32 %v1021, %v1021
        %v1024 = vsel %vm637, %v1022, 0.0
        %1025 = vadd.xlane.f32.xlu0 %v1024
        %v1026 = vpop.xlane.xlu0 %1025
        %v1027 = vsel %vm637, %v1023, 0.0
        %1028 = vadd.xlane.f32.xlu0 %v1027
        %v1029 = vpop.xlane.xlu0 %1028
        %v1030 = vmul.f32 %v1026, %v1017
        %v1031 = vmul.f32 %v1029, %v1017
        %v1032 = vadd.f32 %v1030, 1e-05
        %v1033 = vadd.f32 %v1031, 1e-05
        %v1034 = vrsqrt.pop %v1032
        %v1035 = vrsqrt.pop %v1033
        %v1036 = vmul.f32 %v1020, %v1034
        %v1037 = vmul.f32 %v1021, %v1035
        %v1038 = vld [vmem:[%s7] sm:$0x1]
        %v1040 = vlaneseq
        %v1041 = vshrl.u32 %v1040, 7
        %v1042 = vsub.s32 0, %v1041
        %v1043 = vrot.slane %v1038, %v1042
        %v1045 = vmul.f32 %v1036, %v1043
        %v1046 = vmul.f32 %v1037, %v1043
        %v1047 = vld [vmem:[%s8] sm:$0x1]
        %v1049 = vlaneseq
        %v1050 = vshrl.u32 %v1049, 7
        %v1051 = vsub.s32 0, %v1050
        %v1052 = vrot.slane %v1047, %v1051
        %v1054 = vadd.f32 %v1045, %v1052
        %v1055 = vadd.f32 %v1046, %v1052
        %v1056 = vld [vmem:[%s9] sm:$0xff]
        %v1057 = vld [vmem:[%s9 + $0x8] sm:$0xff]
        %v1058 = vld [vmem:[%s9 + $0x10] sm:$0xff]
        %v1059 = vld [vmem:[%s9 + $0x18] sm:$0xff]
        %v1060 = vld [vmem:[%s10] sm:$0x1]
        %v1062 = vlaneseq
        %v1063 = vshrl.u32 %v1062, 7
        %v1064 = vsub.s32 0, %v1063
        %v1065 = vrot.slane %v1060, %v1064
        %v1068 = vsel %vm637, %v1054, 0
        %v1071 = vsel %vm637, %v1055, 0
        %1073 = vmatprep.subr.mxu0 0.0
        %1074 = vmatpush1.msra.mxu0 0.0
        %1075 = vmatprep.subr.mxu0 0.0
        %1076 = vmatpush1.msra.mxu0 0.0
        %1077 = vmatprep.subr.mxu0 0.0
        %1078 = vmatpush1.msra.mxu0 0.0
        %1079 = vmatprep.subr.mxu0 0.0
        %1080 = vmatpush1.msra.mxu0 0.0
        %1081 = vmatprep.subr.mxu0 0.0
        %1082 = vmatpush1.msra.mxu0 0.0
        %1083 = vmatprep.subr.mxu0 0.0
        %1084 = vmatpush1.msra.mxu0 0.0
        %1085 = vmatprep.subr.mxu0 0.0
        %1086 = vmatpush1.msra.mxu0 0.0
        %1087 = vmatprep.subr.mxu0 0.0
        %1088 = vmatpush1.msra.mxu0 0.0
        %1089 = vmatprep.subr.mxu0 0.0
        %1090 = vmatpush1.msra.mxu0 0.0
        %1091 = vmatprep.subr.mxu0 0.0
        %1092 = vmatpush1.msra.mxu0 0.0
        %1093 = vmatprep.subr.mxu0 0.0
        %1094 = vmatpush1.msra.mxu0 0.0
        %1095 = vmatprep.subr.mxu0 0.0
        %1096 = vmatpush1.msra.mxu0 0.0
        %1097 = vmatprep.subr.mxu0 0.0
        %1098 = vmatpush1.msra.mxu0 %v1059
        %1099 = vmatprep.subr.mxu0 0.0
        %1100 = vmatpush1.msra.mxu0 %v1058
        %1101 = vmatprep.subr.mxu0 0.0
        %1102 = vmatpush1.msra.mxu0 %v1057
        %1103 = vmatprep.subr.mxu0 0.0
        %1104 = vmatpush1.msra.mxu0 %v1056
        %1105 = vmatprep.subr.mxu0 0.0
        %1106 = vmatpush2.msra.mxu0 0.0
        %1107 = vmatprep.subr.mxu0 0.0
        %1108 = vmatpush2.msra.mxu0 0.0
        %1109 = vmatprep.subr.mxu0 0.0
        %1110 = vmatpush2.msra.mxu0 0.0
        %1111 = vmatprep.subr.mxu0 0.0
        %1112 = vmatpush2.msra.mxu0 0.0
        %1113 = vmatprep.subr.mxu0 0.0
        %1114 = vmatpush2.msra.mxu0 0.0
        %1115 = vmatprep.subr.mxu0 0.0
        %1116 = vmatpush2.msra.mxu0 0.0
        %1117 = vmatprep.subr.mxu0 0.0
        %1118 = vmatpush2.msra.mxu0 0.0
        %1119 = vmatprep.subr.mxu0 0.0
        %1120 = vmatpush2.msra.mxu0 0.0
        %1121 = vmatprep.subr.mxu0 0.0
        %1122 = vmatpush2.msra.mxu0 0.0
        %1123 = vmatprep.subr.mxu0 0.0
        %1124 = vmatpush2.msra.mxu0 0.0
        %1125 = vmatprep.subr.mxu0 0.0
        %1126 = vmatpush2.msra.mxu0 0.0
        %1127 = vmatprep.subr.mxu0 0.0
        %1128 = vmatpush2.msra.mxu0 0.0
        %1129 = vmatprep.subr.mxu0 0.0
        %1130 = vmatpush2.msra.mxu0 0.0
        %1131 = vmatprep.subr.mxu0 0.0
        %1132 = vmatpush2.msra.mxu0 0.0
        %1133 = vmatprep.subr.mxu0 0.0
        %1134 = vmatpush2.msra.mxu0 0.0
        %1135 = vmatprep.subr.mxu0 0.0
        %1136 = vmatpush2.msra.mxu0 0.0
        %1137 = vmatprep.mubr.f32.mxu0 0.0
        %1138 = vmatmul.mubr.f32.gmra.mxu0 %v1068
        %v1139 = vpop.f32.mrf.mxu0
        %v1140 = vadd.f32 %v1065, %v1139
        %v1141 = vpop.f32.mrf.mxu0
        %1142 = vmatprep.mubr.f32.mxu0 0.0
        %1143 = vmatmul.mubr.f32.gmra.mxu0 %v1071
        %v1144 = vpop.f32.mrf.mxu0
        %v1145 = vadd.f32 %v1065, %v1144
        %v1146 = vpop.f32.mrf.mxu0
        %1147 = vdwg.mxu0
        %v1148 = vmul.f32 %v1140, 0.5
        %v1149 = vmul.f32 %v1145, 0.5
        %v1150 = vmul.f32 %v1140, 0.70710677
        %v1151 = vmul.f32 %v1145, 0.70710677
        %vm1152 = vcmp.ge.f32.partialorder %v1150, 0.0
        %vm1153 = vcmp.ge.f32.partialorder %v1151, 0.0
        %v1154 = vsel %vm1152, 1.0, -1.0
        %v1155 = vsel %vm1153, 1.0, -1.0
        %v1156 = vand.u32 2147483647, %v1150
        %v1157 = vand.u32 2147483647, %v1151
        %v1158 = vmul.f32 %v1156, 0.3275911
        %v1159 = vmul.f32 %v1157, 0.3275911
        %v1160 = vadd.f32 %v1158, 1.0
        %v1161 = vadd.f32 %v1159, 1.0
        %v1162 = vrcp.pop %v1160
        %v1163 = vmul.f32 1.0, %v1162
        %v1164 = vrcp.pop %v1161
        %v1165 = vmul.f32 1.0, %v1164
        %v1166 = vmul.f32 %v1163, 1.0614054
        %v1167 = vmul.f32 %v1165, 1.0614054
        %v1168 = vadd.f32 %v1166, -1.4531521
        %v1169 = vadd.f32 %v1167, -1.4531521
        %v1170 = vmul.f32 %v1168, %v1163
        %v1171 = vmul.f32 %v1169, %v1165
        %v1172 = vadd.f32 %v1170, 1.4214138
        %v1173 = vadd.f32 %v1171, 1.4214138
        %v1174 = vmul.f32 %v1172, %v1163
        %v1175 = vmul.f32 %v1173, %v1165
        %v1176 = vadd.f32 %v1174, -0.28449672
        %v1177 = vadd.f32 %v1175, -0.28449672
        %v1178 = vmul.f32 %v1176, %v1163
        %v1179 = vmul.f32 %v1177, %v1165
        %v1180 = vadd.f32 %v1178, 0.2548296
        %v1181 = vadd.f32 %v1179, 0.2548296
        %v1182 = vmul.f32 %v1180, %v1163
        %v1183 = vmul.f32 %v1181, %v1165
        %v1184 = vsub.f32 0.0, %v1156
        %v1185 = vsub.f32 0.0, %v1157
        %v1186 = vmul.f32 %v1184, %v1156
        %v1187 = vmul.f32 %v1185, %v1157
        %v1188 = vmul.f32 %v1186, 1.442695
        %v1189 = vpow.pop %v1188
        %v1190 = vmul.f32 %v1187, 1.442695
        %v1191 = vpow.pop %v1190
        %v1192 = vmul.f32 %v1182, %v1189
        %v1193 = vmul.f32 %v1183, %v1191
        %v1194 = vsub.f32 1.0, %v1192
        %v1195 = vsub.f32 1.0, %v1193
        %v1196 = vmul.f32 %v1154, %v1194
        %v1197 = vmul.f32 %v1155, %v1195
        %v1198 = vadd.f32 %v1196, 1.0
        %v1199 = vadd.f32 %v1197, 1.0
        %v1200 = vmul.f32 %v1148, %v1198
        %v1201 = vmul.f32 %v1149, %v1199
        %v1202 = vld [vmem:[%s11] sm:$0xff]
        %v1203 = vld [vmem:[%s12] sm:$0x1]
        %v1205 = vlaneseq
        %v1206 = vshrl.u32 %v1205, 7
        %v1207 = vsub.s32 0, %v1206
        %v1208 = vrot.slane %v1203, %v1207
        %vm1210 = vcmask 64512
        %v1212 = vsel %vm1210, %v1200, 0
        %v1215 = vsel %vm1210, %v1201, 0
        %1217 = vmatprep.subr.mxu0 0.0
        %1218 = vmatpush1.msra.mxu0 0.0
        %1219 = vmatprep.subr.mxu0 0.0
        %1220 = vmatpush1.msra.mxu0 0.0
        %1221 = vmatprep.subr.mxu0 0.0
        %1222 = vmatpush1.msra.mxu0 0.0
        %1223 = vmatprep.subr.mxu0 0.0
        %1224 = vmatpush1.msra.mxu0 0.0
        %1225 = vmatprep.subr.mxu0 0.0
        %1226 = vmatpush1.msra.mxu0 0.0
        %1227 = vmatprep.subr.mxu0 0.0
        %1228 = vmatpush1.msra.mxu0 0.0
        %1229 = vmatprep.subr.mxu0 0.0
        %1230 = vmatpush1.msra.mxu0 0.0
        %1231 = vmatprep.subr.mxu0 0.0
        %1232 = vmatpush1.msra.mxu0 0.0
        %1233 = vmatprep.subr.mxu0 0.0
        %1234 = vmatpush1.msra.mxu0 0.0
        %1235 = vmatprep.subr.mxu0 0.0
        %1236 = vmatpush1.msra.mxu0 0.0
        %1237 = vmatprep.subr.mxu0 0.0
        %1238 = vmatpush1.msra.mxu0 0.0
        %1239 = vmatprep.subr.mxu0 0.0
        %1240 = vmatpush1.msra.mxu0 0.0
        %1241 = vmatprep.subr.mxu0 0.0
        %1242 = vmatpush1.msra.mxu0 0.0
        %1243 = vmatprep.subr.mxu0 0.0
        %1244 = vmatpush1.msra.mxu0 0.0
        %1245 = vmatprep.subr.mxu0 0.0
        %1246 = vmatpush1.msra.mxu0 0.0
        %1247 = vmatprep.subr.mxu0 0.0
        %1248 = vmatpush1.msra.mxu0 %v1202
        %1249 = vmatprep.subr.mxu0 0.0
        %1250 = vmatpush2.msra.mxu0 0.0
        %1251 = vmatprep.subr.mxu0 0.0
        %1252 = vmatpush2.msra.mxu0 0.0
        %1253 = vmatprep.subr.mxu0 0.0
        %1254 = vmatpush2.msra.mxu0 0.0
        %1255 = vmatprep.subr.mxu0 0.0
        %1256 = vmatpush2.msra.mxu0 0.0
        %1257 = vmatprep.subr.mxu0 0.0
        %1258 = vmatpush2.msra.mxu0 0.0
        %1259 = vmatprep.subr.mxu0 0.0
        %1260 = vmatpush2.msra.mxu0 0.0
        %1261 = vmatprep.subr.mxu0 0.0
        %1262 = vmatpush2.msra.mxu0 0.0
        %1263 = vmatprep.subr.mxu0 0.0
        %1264 = vmatpush2.msra.mxu0 0.0
        %1265 = vmatprep.subr.mxu0 0.0
        %1266 = vmatpush2.msra.mxu0 0.0
        %1267 = vmatprep.subr.mxu0 0.0
        %1268 = vmatpush2.msra.mxu0 0.0
        %1269 = vmatprep.subr.mxu0 0.0
        %1270 = vmatpush2.msra.mxu0 0.0
        %1271 = vmatprep.subr.mxu0 0.0
        %1272 = vmatpush2.msra.mxu0 0.0
        %1273 = vmatprep.subr.mxu0 0.0
        %1274 = vmatpush2.msra.mxu0 0.0
        %1275 = vmatprep.subr.mxu0 0.0
        %1276 = vmatpush2.msra.mxu0 0.0
        %1277 = vmatprep.subr.mxu0 0.0
        %1278 = vmatpush2.msra.mxu0 0.0
        %1279 = vmatprep.subr.mxu0 0.0
        %1280 = vmatpush2.msra.mxu0 0.0
        %1281 = vmatprep.mubr.f32.mxu0 0.0
        %1282 = vmatmul.mubr.f32.gmra.mxu0 %v1212
        %v1283 = vpop.f32.mrf.mxu0
        %v1284 = vadd.f32 %v1208, %v1283
        %v1285 = vpop.f32.mrf.mxu0
        %1286 = vmatprep.mubr.f32.mxu0 0.0
        %1287 = vmatmul.mubr.f32.gmra.mxu0 %v1215
        %v1288 = vpop.f32.mrf.mxu0
        %v1289 = vadd.f32 %v1208, %v1288
        %v1290 = vpop.f32.mrf.mxu0
        %1291 = vdwg.mxu0
        %v1292 = vstv %s615
        %v1293 = vmul.f32 %v1284, %v1292
        %v1294 = vmul.f32 %v1289, %v1292
        %v1295 = vsel %vm1210, %v1293, -inf
        %v1296 = vrot.slane %v1295, 4
        %v1297 = vmax.f32 %v1295, %v1296
        %v1298 = vrot.slane %v1297, 2
        %v1299 = vmax.f32 %v1297, %v1298
        %v1300 = vrot.slane %v1299, 1
        %v1301 = vmax.f32 %v1299, %v1300
        %v1302 = vsel %vm1210, %v1294, -inf
        %v1303 = vrot.slane %v1302, 4
        %v1304 = vmax.f32 %v1302, %v1303
        %v1305 = vrot.slane %v1304, 2
        %v1306 = vmax.f32 %v1304, %v1305
        %v1307 = vrot.slane %v1306, 1
        %v1308 = vmax.f32 %v1306, %v1307
        %v1309 = vsub.f32 %v1293, %v1301
        %v1310 = vsub.f32 %v1294, %v1308
        %v1311 = vmul.f32 %v1309, 1.442695
        %v1312 = vpow.pop %v1311
        %v1313 = vmul.f32 %v1310, 1.442695
        %v1314 = vpow.pop %v1313
        %v1315 = vsel %vm1210, %v1312, 0.0
        %v1316 = vrot.slane %v1315, 4
        %v1317 = vadd.f32 %v1315, %v1316
        %v1318 = vrot.slane %v1317, 2
        %v1319 = vadd.f32 %v1317, %v1318
        %v1320 = vrot.slane %v1319, 1
        %v1321 = vadd.f32 %v1319, %v1320
        %v1322 = vsel %vm1210, %v1314, 0.0
        %v1323 = vrot.slane %v1322, 4
        %v1324 = vadd.f32 %v1322, %v1323
        %v1325 = vrot.slane %v1324, 2
        %v1326 = vadd.f32 %v1324, %v1325
        %v1327 = vrot.slane %v1326, 1
        %v1328 = vadd.f32 %v1326, %v1327
        %v1329 = vrcp.pop %v1321
        %v1330 = vrcp.pop %v1328
        %v1331 = vmul.f32 %v1312, %v1329
        %v1332 = vmul.f32 %v1314, %v1330
        %v1333 = vlaneseq
        %v1334 = vshrl.u32 %v1333, 7
        %v1335 = vsub.s32 0, %v1334
        %v1336 = vrot.slane %v1331, %v1335
        %1338 = vbcast.lane.b32.xlu0 %v1336, 256
        %v1339 = vpop.permute.xlu0 %1338
        %v1340 = vlaneseq
        %v1341 = vshrl.u32 %v1340, 7
        %v1342 = vsub.s32 1, %v1341
        %v1343 = vrot.slane %v1331, %v1342
        %1345 = vbcast.lane.b32.xlu0 %v1343, 256
        %v1346 = vpop.permute.xlu0 %1345
        %v1347 = vlaneseq
        %v1348 = vshrl.u32 %v1347, 7
        %v1349 = vsub.s32 2, %v1348
        %v1350 = vrot.slane %v1331, %v1349
        %1352 = vbcast.lane.b32.xlu0 %v1350, 256
        %v1353 = vpop.permute.xlu0 %1352
        %v1354 = vlaneseq
        %v1355 = vshrl.u32 %v1354, 7
        %v1356 = vsub.s32 3, %v1355
        %v1357 = vrot.slane %v1331, %v1356
        %1359 = vbcast.lane.b32.xlu0 %v1357, 256
        %v1360 = vpop.permute.xlu0 %1359
        %v1361 = vlaneseq
        %v1362 = vshrl.u32 %v1361, 7
        %v1363 = vsub.s32 4, %v1362
        %v1364 = vrot.slane %v1331, %v1363
        %1366 = vbcast.lane.b32.xlu0 %v1364, 256
        %v1367 = vpop.permute.xlu0 %1366
        %v1368 = vlaneseq
        %v1369 = vshrl.u32 %v1368, 7
        %v1370 = vsub.s32 5, %v1369
        %v1371 = vrot.slane %v1331, %v1370
        %1373 = vbcast.lane.b32.xlu0 %v1371, 256
        %v1374 = vpop.permute.xlu0 %1373
        %v1375 = vlaneseq
        %v1376 = vshrl.u32 %v1375, 7
        %v1377 = vsub.s32 6, %v1376
        %v1378 = vrot.slane %v1331, %v1377
        %1380 = vbcast.lane.b32.xlu0 %v1378, 256
        %v1381 = vpop.permute.xlu0 %1380
        %v1382 = vlaneseq
        %v1383 = vshrl.u32 %v1382, 7
        %v1384 = vsub.s32 7, %v1383
        %v1385 = vrot.slane %v1331, %v1384
        %1387 = vbcast.lane.b32.xlu0 %v1385, 256
        %v1388 = vpop.permute.xlu0 %1387
        %v1389 = vlaneseq
        %v1390 = vshrl.u32 %v1389, 7
        %v1391 = vsub.s32 0, %v1390
        %v1392 = vrot.slane %v1332, %v1391
        %1394 = vbcast.lane.b32.xlu0 %v1392, 256
        %v1395 = vpop.permute.xlu0 %1394
        %v1396 = vlaneseq
        %v1397 = vshrl.u32 %v1396, 7
        %v1398 = vsub.s32 1, %v1397
        %v1399 = vrot.slane %v1332, %v1398
        %1401 = vbcast.lane.b32.xlu0 %v1399, 256
        %v1402 = vpop.permute.xlu0 %1401
        %v1403 = vlaneseq
        %v1404 = vshrl.u32 %v1403, 7
        %v1405 = vsub.s32 2, %v1404
        %v1406 = vrot.slane %v1332, %v1405
        %1408 = vbcast.lane.b32.xlu0 %v1406, 256
        %v1409 = vpop.permute.xlu0 %1408
        %v1410 = vlaneseq
        %v1411 = vshrl.u32 %v1410, 7
        %v1412 = vsub.s32 3, %v1411
        %v1413 = vrot.slane %v1332, %v1412
        %1415 = vbcast.lane.b32.xlu0 %v1413, 256
        %v1416 = vpop.permute.xlu0 %1415
        %v1417 = vlaneseq
        %v1418 = vshrl.u32 %v1417, 7
        %v1419 = vsub.s32 4, %v1418
        %v1420 = vrot.slane %v1332, %v1419
        %1422 = vbcast.lane.b32.xlu0 %v1420, 256
        %v1423 = vpop.permute.xlu0 %1422
        %v1424 = vlaneseq
        %v1425 = vshrl.u32 %v1424, 7
        %v1426 = vsub.s32 5, %v1425
        %v1427 = vrot.slane %v1332, %v1426
        %1429 = vbcast.lane.b32.xlu0 %v1427, 256
        %v1430 = vpop.permute.xlu0 %1429
        %v1431 = vlaneseq
        %v1432 = vshrl.u32 %v1431, 7
        %v1433 = vsub.s32 6, %v1432
        %v1434 = vrot.slane %v1332, %v1433
        %1436 = vbcast.lane.b32.xlu0 %v1434, 256
        %v1437 = vpop.permute.xlu0 %1436
        %v1438 = vlaneseq
        %v1439 = vshrl.u32 %v1438, 7
        %v1440 = vsub.s32 7, %v1439
        %v1441 = vrot.slane %v1332, %v1440
        %1443 = vbcast.lane.b32.xlu0 %v1441, 256
        %v1444 = vpop.permute.xlu0 %1443
        %v1447 = vcombine.high %v891, %v891
        %v1449 = vunpack.c.l.s4 1966171168
        %v1450 = vunpack.c.0.s8 %v1449
        %v1451 = vlaneseq
        %v1452 = vshrl.u32 %v1451, 7
        %v1453 = vsub.s32 %v1450, %v1452
        %v1454 = vrot.slane %v891, %v1453
        %v1456 = vunpack.c.l.s4 1966171168
        %v1457 = vunpack.c.0.s8 %v1456
        %v1458 = vlaneseq
        %v1459 = vshrl.u32 %v1458, 7
        %v1460 = vsub.s32 %v1457, %v1459
        %v1461 = vrot.slane %v1447, %v1460
        %v1462 = vcombine.high %v1454, %v1454
        %v1463 = vcombine.high %v1461, %v1461
        %v1465 = vunpack.c.l.s4 1966171168
        %v1466 = vunpack.c.0.s8 %v1465
        %v1467 = vlaneseq
        %v1468 = vshrl.u32 %v1467, 7
        %v1469 = vsub.s32 %v1466, %v1468
        %v1470 = vrot.slane %v1454, %v1469
        %v1472 = vunpack.c.l.s4 1966171168
        %v1473 = vunpack.c.0.s8 %v1472
        %v1474 = vlaneseq
        %v1475 = vshrl.u32 %v1474, 7
        %v1476 = vsub.s32 %v1473, %v1475
        %v1477 = vrot.slane %v1461, %v1476
        %v1479 = vunpack.c.l.s4 1966171168
        %v1480 = vunpack.c.0.s8 %v1479
        %v1481 = vlaneseq
        %v1482 = vshrl.u32 %v1481, 7
        %v1483 = vsub.s32 %v1480, %v1482
        %v1484 = vrot.slane %v1462, %v1483
        %v1486 = vunpack.c.l.s4 1966171168
        %v1487 = vunpack.c.0.s8 %v1486
        %v1488 = vlaneseq
        %v1489 = vshrl.u32 %v1488, 7
        %v1490 = vsub.s32 %v1487, %v1489
        %v1491 = vrot.slane %v1463, %v1490
        %v1492 = vcombine.high %v1470, %v1470
        %v1493 = vcombine.high %v1477, %v1477
        %v1494 = vcombine.high %v1484, %v1484
        %v1495 = vcombine.high %v1491, %v1491
        %v1496 = vcombine.high %v964, %v964
        %v1498 = vunpack.c.l.s4 1966171168
        %v1499 = vunpack.c.0.s8 %v1498
        %v1500 = vlaneseq
        %v1501 = vshrl.u32 %v1500, 7
        %v1502 = vsub.s32 %v1499, %v1501
        %v1503 = vrot.slane %v964, %v1502
        %v1505 = vunpack.c.l.s4 1966171168
        %v1506 = vunpack.c.0.s8 %v1505
        %v1507 = vlaneseq
        %v1508 = vshrl.u32 %v1507, 7
        %v1509 = vsub.s32 %v1506, %v1508
        %v1510 = vrot.slane %v1496, %v1509
        %v1511 = vcombine.high %v1503, %v1503
        %v1512 = vcombine.high %v1510, %v1510
        %v1514 = vunpack.c.l.s4 1966171168
        %v1515 = vunpack.c.0.s8 %v1514
        %v1516 = vlaneseq
        %v1517 = vshrl.u32 %v1516, 7
        %v1518 = vsub.s32 %v1515, %v1517
        %v1519 = vrot.slane %v1503, %v1518
        %v1521 = vunpack.c.l.s4 1966171168
        %v1522 = vunpack.c.0.s8 %v1521
        %v1523 = vlaneseq
        %v1524 = vshrl.u32 %v1523, 7
        %v1525 = vsub.s32 %v1522, %v1524
        %v1526 = vrot.slane %v1510, %v1525
        %v1528 = vunpack.c.l.s4 1966171168
        %v1529 = vunpack.c.0.s8 %v1528
        %v1530 = vlaneseq
        %v1531 = vshrl.u32 %v1530, 7
        %v1532 = vsub.s32 %v1529, %v1531
        %v1533 = vrot.slane %v1511, %v1532
        %v1535 = vunpack.c.l.s4 1966171168
        %v1536 = vunpack.c.0.s8 %v1535
        %v1537 = vlaneseq
        %v1538 = vshrl.u32 %v1537, 7
        %v1539 = vsub.s32 %v1536, %v1538
        %v1540 = vrot.slane %v1512, %v1539
        %v1541 = vcombine.high %v1519, %v1519
        %v1542 = vcombine.high %v1526, %v1526
        %v1543 = vcombine.high %v1533, %v1533
        %v1544 = vcombine.high %v1540, %v1540
        %v1545 = vlaneseq
        %v1546 = vshrl.u32 %v1545, 7
        %v1547 = vsub.s32 0, %v1546
        %v1548 = vrot.slane %v1470, %v1547
        %v1549 = vlaneseq
        %v1550 = vshrl.u32 %v1549, 7
        %v1551 = vsub.s32 0, %v1550
        %v1552 = vrot.slane %v1484, %v1551
        %v1553 = vlaneseq
        %v1554 = vshrl.u32 %v1553, 7
        %v1555 = vsub.s32 0, %v1554
        %v1556 = vrot.slane %v1492, %v1555
        %v1557 = vlaneseq
        %v1558 = vshrl.u32 %v1557, 7
        %v1559 = vsub.s32 0, %v1558
        %v1560 = vrot.slane %v1494, %v1559
        %v1561 = vlaneseq
        %v1562 = vshrl.u32 %v1561, 7
        %v1563 = vsub.s32 0, %v1562
        %v1564 = vrot.slane %v1477, %v1563
        %v1565 = vlaneseq
        %v1566 = vshrl.u32 %v1565, 7
        %v1567 = vsub.s32 0, %v1566
        %v1568 = vrot.slane %v1491, %v1567
        %v1569 = vlaneseq
        %v1570 = vshrl.u32 %v1569, 7
        %v1571 = vsub.s32 0, %v1570
        %v1572 = vrot.slane %v1493, %v1571
        %v1573 = vlaneseq
        %v1574 = vshrl.u32 %v1573, 7
        %v1575 = vsub.s32 0, %v1574
        %v1576 = vrot.slane %v1495, %v1575
        %v1577 = vlaneseq
        %v1578 = vshrl.u32 %v1577, 7
        %v1579 = vsub.s32 0, %v1578
        %v1580 = vrot.slane %v1519, %v1579
        %v1581 = vlaneseq
        %v1582 = vshrl.u32 %v1581, 7
        %v1583 = vsub.s32 0, %v1582
        %v1584 = vrot.slane %v1533, %v1583
        %v1585 = vlaneseq
        %v1586 = vshrl.u32 %v1585, 7
        %v1587 = vsub.s32 0, %v1586
        %v1588 = vrot.slane %v1541, %v1587
        %v1589 = vlaneseq
        %v1590 = vshrl.u32 %v1589, 7
        %v1591 = vsub.s32 0, %v1590
        %v1592 = vrot.slane %v1543, %v1591
        %v1593 = vlaneseq
        %v1594 = vshrl.u32 %v1593, 7
        %v1595 = vsub.s32 0, %v1594
        %v1596 = vrot.slane %v1526, %v1595
        %v1597 = vlaneseq
        %v1598 = vshrl.u32 %v1597, 7
        %v1599 = vsub.s32 0, %v1598
        %v1600 = vrot.slane %v1540, %v1599
        %v1601 = vlaneseq
        %v1602 = vshrl.u32 %v1601, 7
        %v1603 = vsub.s32 0, %v1602
        %v1604 = vrot.slane %v1542, %v1603
        %v1605 = vlaneseq
        %v1606 = vshrl.u32 %v1605, 7
        %v1607 = vsub.s32 0, %v1606
        %v1608 = vrot.slane %v1544, %v1607
        %v1625 = vmul.f32 %v1339, %v1548
        %v1626 = vmul.f32 %v1346, %v1552
        %v1627 = vmul.f32 %v1353, %v1556
        %v1628 = vmul.f32 %v1360, %v1560
        %v1629 = vmul.f32 %v1367, %v1564
        %v1630 = vmul.f32 %v1374, %v1568
        %v1631 = vmul.f32 %v1381, %v1572
        %v1632 = vmul.f32 %v1388, %v1576
        %v1633 = vmul.f32 %v1395, %v1580
        %v1634 = vmul.f32 %v1402, %v1584
        %v1635 = vmul.f32 %v1409, %v1588
        %v1636 = vmul.f32 %v1416, %v1592
        %v1637 = vmul.f32 %v1423, %v1596
        %v1638 = vmul.f32 %v1430, %v1600
        %v1639 = vmul.f32 %v1437, %v1604
        %v1640 = vmul.f32 %v1444, %v1608
        %v1641 = vsel %vm637, %v1625, 0.0
        %v1642 = vsel %vm637, %v1626, 0.0
        %v1643 = vadd.f32 %v1641, %v1642
        %v1644 = vsel %vm637, %v1627, 0.0
        %v1645 = vadd.f32 %v1643, %v1644
        %v1646 = vsel %vm637, %v1628, 0.0
        %v1647 = vadd.f32 %v1645, %v1646
        %v1648 = vsel %vm637, %v1629, 0.0
        %v1649 = vadd.f32 %v1647, %v1648
        %v1650 = vsel %vm637, %v1630, 0.0
        %v1651 = vadd.f32 %v1649, %v1650
        %v1652 = vsel %vm637, %v1631, 0.0
        %v1653 = vadd.f32 %v1651, %v1652
        %v1654 = vsel %vm637, %v1632, 0.0
        %v1655 = vadd.f32 %v1653, %v1654
        %v1656 = vsel %vm637, %v1633, 0.0
        %v1657 = vsel %vm637, %v1634, 0.0
        %v1658 = vadd.f32 %v1656, %v1657
        %v1659 = vsel %vm637, %v1635, 0.0
        %v1660 = vadd.f32 %v1658, %v1659
        %v1661 = vsel %vm637, %v1636, 0.0
        %v1662 = vadd.f32 %v1660, %v1661
        %v1663 = vsel %vm637, %v1637, 0.0
        %v1664 = vadd.f32 %v1662, %v1663
        %v1665 = vsel %vm637, %v1638, 0.0
        %v1666 = vadd.f32 %v1664, %v1665
        %v1667 = vsel %vm637, %v1639, 0.0
        %v1668 = vadd.f32 %v1666, %v1667
        %v1669 = vsel %vm637, %v1640, 0.0
        %v1670 = vadd.f32 %v1668, %v1669
        %vm1671 = vcmp.eq.s32.totalorder %v793, 4
        %v1672 = vsel %vm1671, 1, 0
        %vm1673 = vcmp.eq.s32.totalorder %v1672, 1
        %v1674 = vsel %vm1673, %v1001, %v1655
        %v1675 = vsel %vm1673, %v1010, %v1670
        %v1676 = vmul.f32 %v1674, %v1674
        %v1677 = vmul.f32 %v1675, %v1675
        %v1678 = vsel %vm637, %v1676, 0.0
        %1679 = vadd.xlane.f32.xlu0 %v1678
        %v1680 = vpop.xlane.xlu0 %1679
        %v1681 = vsel %vm637, %v1677, 0.0
        %1682 = vadd.xlane.f32.xlu0 %v1681
        %v1683 = vpop.xlane.xlu0 %1682
        %v1684 = vmax.f32 %v1680, 1e-24
        %v1685 = vmax.f32 %v1683, 1e-24
        %v1686 = vrsqrt.pop %v1684
        %v1687 = vrsqrt.pop %v1685
        %v1688 = vmul.f32 %v1674, %v1686
        %v1689 = vmul.f32 %v1675, %v1687
        %v1691 = vsel %vm637, %v708, 0
        %v1694 = vsel %vm637, %v789, 0
        %v1697 = vsel %vm637, %v1688, 0
        %v1700 = vsel %vm637, %v1689, 0
        %1702 = vmatprep.subr.mxu0 0.0
        %1703 = vmatpush1.xpose.msra.mxu0 0.0
        %1704 = vmatprep.subr.mxu0 0.0
        %1705 = vmatpush1.xpose.msra.mxu0 0.0
        %1706 = vmatprep.subr.mxu0 0.0
        %1707 = vmatpush1.xpose.msra.mxu0 0.0
        %1708 = vmatprep.subr.mxu0 0.0
        %1709 = vmatpush1.xpose.msra.mxu0 0.0
        %1710 = vmatprep.subr.mxu0 0.0
        %1711 = vmatpush1.xpose.msra.mxu0 0.0
        %1712 = vmatprep.subr.mxu0 0.0
        %1713 = vmatpush1.xpose.msra.mxu0 0.0
        %1714 = vmatprep.subr.mxu0 0.0
        %1715 = vmatpush1.xpose.msra.mxu0 0.0
        %1716 = vmatprep.subr.mxu0 0.0
        %1717 = vmatpush1.xpose.msra.mxu0 0.0
        %1718 = vmatprep.subr.mxu0 0.0
        %1719 = vmatpush1.xpose.msra.mxu0 0.0
        %1720 = vmatprep.subr.mxu0 0.0
        %1721 = vmatpush1.xpose.msra.mxu0 0.0
        %1722 = vmatprep.subr.mxu0 0.0
        %1723 = vmatpush1.xpose.msra.mxu0 0.0
        %1724 = vmatprep.subr.mxu0 0.0
        %1725 = vmatpush1.xpose.msra.mxu0 0.0
        %1726 = vmatprep.subr.mxu0 0.0
        %1727 = vmatpush1.xpose.msra.mxu0 0.0
        %1728 = vmatprep.subr.mxu0 0.0
        %1729 = vmatpush1.xpose.msra.mxu0 0.0
        %1730 = vmatprep.subr.mxu0 0.0
        %1731 = vmatpush1.xpose.msra.mxu0 %v1700
        %1732 = vmatprep.subr.mxu0 0.0
        %1733 = vmatpush1.xpose.msra.mxu0 %v1697
        %1734 = vmatprep.subr.mxu0 0.0
        %1735 = vmatpush2.xpose.msra.mxu0 0.0
        %1736 = vmatprep.subr.mxu0 0.0
        %1737 = vmatpush2.xpose.msra.mxu0 0.0
        %1738 = vmatprep.subr.mxu0 0.0
        %1739 = vmatpush2.xpose.msra.mxu0 0.0
        %1740 = vmatprep.subr.mxu0 0.0
        %1741 = vmatpush2.xpose.msra.mxu0 0.0
        %1742 = vmatprep.subr.mxu0 0.0
        %1743 = vmatpush2.xpose.msra.mxu0 0.0
        %1744 = vmatprep.subr.mxu0 0.0
        %1745 = vmatpush2.xpose.msra.mxu0 0.0
        %1746 = vmatprep.subr.mxu0 0.0
        %1747 = vmatpush2.xpose.msra.mxu0 0.0
        %1748 = vmatprep.subr.mxu0 0.0
        %1749 = vmatpush2.xpose.msra.mxu0 0.0
        %1750 = vmatprep.subr.mxu0 0.0
        %1751 = vmatpush2.xpose.msra.mxu0 0.0
        %1752 = vmatprep.subr.mxu0 0.0
        %1753 = vmatpush2.xpose.msra.mxu0 0.0
        %1754 = vmatprep.subr.mxu0 0.0
        %1755 = vmatpush2.xpose.msra.mxu0 0.0
        %1756 = vmatprep.subr.mxu0 0.0
        %1757 = vmatpush2.xpose.msra.mxu0 0.0
        %1758 = vmatprep.subr.mxu0 0.0
        %1759 = vmatpush2.xpose.msra.mxu0 0.0
        %1760 = vmatprep.subr.mxu0 0.0
        %1761 = vmatpush2.xpose.msra.mxu0 0.0
        %1762 = vmatprep.subr.mxu0 0.0
        %1763 = vmatpush2.xpose.msra.mxu0 0.0
        %1764 = vmatprep.subr.mxu0 0.0
        %1765 = vmatpush2.xpose.msra.mxu0 0.0
        %1766 = vmatprep.mubr.f32.mxu0 0.0
        %1767 = vmatmul.mubr.f32.gmra.mxu0 %v639
        %v1768 = vpop.f32.mrf.mxu0
        %v1769 = vadd.f32 0.0, %v1768
        %v1770 = vpop.f32.mrf.mxu0
        %1771 = vmatprep.mubr.f32.mxu0 0.0
        %1772 = vmatmul.mubr.f32.gmra.mxu0 %v1691
        %v1773 = vpop.f32.mrf.mxu0
        %v1774 = vadd.f32 0.0, %v1773
        %v1775 = vpop.f32.mrf.mxu0
        %1776 = vmatprep.mubr.f32.mxu0 0.0
        %1777 = vmatmul.mubr.f32.gmra.mxu0 %v1694
        %v1778 = vpop.f32.mrf.mxu0
        %v1779 = vadd.f32 0.0, %v1778
        %v1780 = vpop.f32.mrf.mxu0
        %1781 = vdwg.mxu0
        %vm1782 = vcmp.ge.f32.partialorder %v1769, 0.0
        %v1783 = vmul.f32 %v1769, 0.1
        %v1784 = vsel %vm1782, %v1769, %v1783
        %v1785 = vstv %s616
        %v1786 = vmul.f32 %v1774, %v1785
        %v1787 = vmul.f32 %v1779, %v1785
        %v1788 = vadd.s32 %v793, 8
        %v1789 = vmul.u32 %v813, 8
        %vm1790 = vcmp.ge.s32.totalorder %v793, %v1789
        %vm1791 = vcmp.ge.s32.totalorder %v1788, %v1789
        %v1792 = vadd.s32 %v1789, 5
        %vm1793 = vcmp.lt.s32.totalorder %v793, %v1792
        %vm1794 = vcmp.lt.s32.totalorder %v1788, %v1792
        %vm1795 = vmand %vm1790, %vm1793
        %vm1796 = vmand %vm1791, %vm1794
        %v1797 = vsel %vm1795, 1, 0
        %v1798 = vsel %vm1796, 1, 0
        %v1799 = vcvt.s32.f32 %v1797
        %v1800 = vcvt.s32.f32 %v1798
        %vm1801 = vcmp.gt.f32.partialorder %v797, 0.0
        %v1802 = vsel %vm1801, 1, 0
        %vm1803 = vcmp.eq.s32.totalorder %v1802, 1
        %v1804 = vsel %vm1803, %v1786, -1e+30
        %v1805 = vsel %vm820, %v1804, -inf
        %v1806 = vrot.slane %v1805, 4
        %v1807 = vmax.f32 %v1805, %v1806
        %v1808 = vrot.slane %v1807, 2
        %v1809 = vmax.f32 %v1807, %v1808
        %v1810 = vrot.slane %v1809, 1
        %v1811 = vmax.f32 %v1809, %v1810
        %v1812 = vsub.f32 %v1804, %v1811
        %v1813 = vmul.f32 %v1812, 1.442695
        %v1814 = vpow.pop %v1813
        %v1815 = vsel %vm820, %v1814, 0.0
        %v1816 = vrot.slane %v1815, 4
        %v1817 = vadd.f32 %v1815, %v1816
        %v1818 = vrot.slane %v1817, 2
        %v1819 = vadd.f32 %v1817, %v1818
        %v1820 = vrot.slane %v1819, 1
        %v1821 = vadd.f32 %v1819, %v1820
        %v1822 = vrcp.pop %v1821
        %v1823 = vmul.f32 %v1814, %v1822
        %v1824 = vsel %vm820, %v1787, -inf
        %1825 = vmax.xlane.f32.xlu0 %v1824
        %v1826 = vpop.xlane.xlu0 %1825
        %v1827 = vsub.f32 %v1787, %v1826
        %v1828 = vmul.f32 %v1827, 1.442695
        %v1829 = vpow.pop %v1828
        %v1831 = vsel %vm820, %v1829, 0
        %1833 = vmatprep.subr.mxu0 0.0
        %1834 = vmatpush1.msra.mxu0 0.0
        %1835 = vmatprep.subr.mxu0 0.0
        %1836 = vmatpush1.msra.mxu0 0.0
        %1837 = vmatprep.subr.mxu0 0.0
        %1838 = vmatpush1.msra.mxu0 0.0
        %1839 = vmatprep.subr.mxu0 0.0
        %1840 = vmatpush1.msra.mxu0 0.0
        %1841 = vmatprep.subr.mxu0 0.0
        %1842 = vmatpush1.msra.mxu0 0.0
        %1843 = vmatprep.subr.mxu0 0.0
        %1844 = vmatpush1.msra.mxu0 0.0
        %1845 = vmatprep.subr.mxu0 0.0
        %1846 = vmatpush1.msra.mxu0 0.0
        %1847 = vmatprep.subr.mxu0 0.0
        %1848 = vmatpush1.msra.mxu0 0.0
        %1849 = vmatprep.subr.mxu0 0.0
        %1850 = vmatpush1.msra.mxu0 0.0
        %1851 = vmatprep.subr.mxu0 0.0
        %1852 = vmatpush1.msra.mxu0 0.0
        %1853 = vmatprep.subr.mxu0 0.0
        %1854 = vmatpush1.msra.mxu0 0.0
        %1855 = vmatprep.subr.mxu0 0.0
        %1856 = vmatpush1.msra.mxu0 0.0
        %1857 = vmatprep.subr.mxu0 0.0
        %1858 = vmatpush1.msra.mxu0 0.0
        %1859 = vmatprep.subr.mxu0 0.0
        %1860 = vmatpush1.msra.mxu0 0.0
        %1861 = vmatprep.subr.mxu0 0.0
        %1862 = vmatpush1.msra.mxu0 %v1800
        %1863 = vmatprep.subr.mxu0 0.0
        %1864 = vmatpush1.msra.mxu0 %v1799
        %1865 = vmatprep.subr.mxu0 0.0
        %1866 = vmatpush2.msra.mxu0 0.0
        %1867 = vmatprep.subr.mxu0 0.0
        %1868 = vmatpush2.msra.mxu0 0.0
        %1869 = vmatprep.subr.mxu0 0.0
        %1870 = vmatpush2.msra.mxu0 0.0
        %1871 = vmatprep.subr.mxu0 0.0
        %1872 = vmatpush2.msra.mxu0 0.0
        %1873 = vmatprep.subr.mxu0 0.0
        %1874 = vmatpush2.msra.mxu0 0.0
        %1875 = vmatprep.subr.mxu0 0.0
        %1876 = vmatpush2.msra.mxu0 0.0
        %1877 = vmatprep.subr.mxu0 0.0
        %1878 = vmatpush2.msra.mxu0 0.0
        %1879 = vmatprep.subr.mxu0 0.0
        %1880 = vmatpush2.msra.mxu0 0.0
        %1881 = vmatprep.subr.mxu0 0.0
        %1882 = vmatpush2.msra.mxu0 0.0
        %1883 = vmatprep.subr.mxu0 0.0
        %1884 = vmatpush2.msra.mxu0 0.0
        %1885 = vmatprep.subr.mxu0 0.0
        %1886 = vmatpush2.msra.mxu0 0.0
        %1887 = vmatprep.subr.mxu0 0.0
        %1888 = vmatpush2.msra.mxu0 0.0
        %1889 = vmatprep.subr.mxu0 0.0
        %1890 = vmatpush2.msra.mxu0 0.0
        %1891 = vmatprep.subr.mxu0 0.0
        %1892 = vmatpush2.msra.mxu0 0.0
        %1893 = vmatprep.subr.mxu0 0.0
        %1894 = vmatpush2.msra.mxu0 0.0
        %1895 = vmatprep.subr.mxu0 0.0
        %1896 = vmatpush2.msra.mxu0 0.0
        %1897 = vmatprep.mubr.f32.mxu0 0.0
        %1898 = vmatmul.mubr.f32.gmra.mxu0 %v1831
        %v1899 = vpop.f32.mrf.mxu0
        %v1900 = vadd.f32 0.0, %v1899
        %v1901 = vpop.f32.mrf.mxu0
        %1902 = vdwg.mxu0
        %1903 = vmatprep.subr.mxu0 0.0
        %1904 = vmatpush1.xpose.msra.mxu0 0.0
        %1905 = vmatprep.subr.mxu0 0.0
        %1906 = vmatpush1.xpose.msra.mxu0 0.0
        %1907 = vmatprep.subr.mxu0 0.0
        %1908 = vmatpush1.xpose.msra.mxu0 0.0
        %1909 = vmatprep.subr.mxu0 0.0
        %1910 = vmatpush1.xpose.msra.mxu0 0.0
        %1911 = vmatprep.subr.mxu0 0.0
        %1912 = vmatpush1.xpose.msra.mxu0 0.0
        %1913 = vmatprep.subr.mxu0 0.0
        %1914 = vmatpush1.xpose.msra.mxu0 0.0
        %1915 = vmatprep.subr.mxu0 0.0
        %1916 = vmatpush1.xpose.msra.mxu0 0.0
        %1917 = vmatprep.subr.mxu0 0.0
        %1918 = vmatpush1.xpose.msra.mxu0 0.0
        %1919 = vmatprep.subr.mxu0 0.0
        %1920 = vmatpush1.xpose.msra.mxu0 0.0
        %1921 = vmatprep.subr.mxu0 0.0
        %1922 = vmatpush1.xpose.msra.mxu0 0.0
        %1923 = vmatprep.subr.mxu0 0.0
        %1924 = vmatpush1.xpose.msra.mxu0 0.0
        %1925 = vmatprep.subr.mxu0 0.0
        %1926 = vmatpush1.xpose.msra.mxu0 0.0
        %1927 = vmatprep.subr.mxu0 0.0
        %1928 = vmatpush1.xpose.msra.mxu0 0.0
        %1929 = vmatprep.subr.mxu0 0.0
        %1930 = vmatpush1.xpose.msra.mxu0 0.0
        %1931 = vmatprep.subr.mxu0 0.0
        %1932 = vmatpush1.xpose.msra.mxu0 %v1800
        %1933 = vmatprep.subr.mxu0 0.0
        %1934 = vmatpush1.xpose.msra.mxu0 %v1799
        %1935 = vmatprep.subr.mxu0 0.0
        %1936 = vmatpush2.xpose.msra.mxu0 0.0
        %1937 = vmatprep.subr.mxu0 0.0
        %1938 = vmatpush2.xpose.msra.mxu0 0.0
        %1939 = vmatprep.subr.mxu0 0.0
        %1940 = vmatpush2.xpose.msra.mxu0 0.0
        %1941 = vmatprep.subr.mxu0 0.0
        %1942 = vmatpush2.xpose.msra.mxu0 0.0
        %1943 = vmatprep.subr.mxu0 0.0
        %1944 = vmatpush2.xpose.msra.mxu0 0.0
        %1945 = vmatprep.subr.mxu0 0.0
        %1946 = vmatpush2.xpose.msra.mxu0 0.0
        %1947 = vmatprep.subr.mxu0 0.0
        %1948 = vmatpush2.xpose.msra.mxu0 0.0
        %1949 = vmatprep.subr.mxu0 0.0
        %1950 = vmatpush2.xpose.msra.mxu0 0.0
        %1951 = vmatprep.subr.mxu0 0.0
        %1952 = vmatpush2.xpose.msra.mxu0 0.0
        %1953 = vmatprep.subr.mxu0 0.0
        %1954 = vmatpush2.xpose.msra.mxu0 0.0
        %1955 = vmatprep.subr.mxu0 0.0
        %1956 = vmatpush2.xpose.msra.mxu0 0.0
        %1957 = vmatprep.subr.mxu0 0.0
        %1958 = vmatpush2.xpose.msra.mxu0 0.0
        %1959 = vmatprep.subr.mxu0 0.0
        %1960 = vmatpush2.xpose.msra.mxu0 0.0
        %1961 = vmatprep.subr.mxu0 0.0
        %1962 = vmatpush2.xpose.msra.mxu0 0.0
        %1963 = vmatprep.subr.mxu0 0.0
        %1964 = vmatpush2.xpose.msra.mxu0 0.0
        %1965 = vmatprep.subr.mxu0 0.0
        %1966 = vmatpush2.xpose.msra.mxu0 0.0
        %1967 = vmatprep.mubr.f32.mxu0 0.0
        %1968 = vmatmul.mubr.f32.gmra.mxu0 %v1900
        %v1969 = vpop.f32.mrf.mxu0
        %v1970 = vadd.f32 0.0, %v1969
        %v1971 = vpop.f32.mrf.mxu0
        %1972 = vdwg.mxu0
        %vm1973 = vcmp.gt.f32.partialorder %v1970, 0.0
        %v1974 = vmax.f32 %v1970, 1e-30
        %v1975 = vrcp.pop %v1974
        %v1976 = vmul.f32 %v1829, %v1975
        %v1977 = vsel %vm1973, %v1976, 0.0
        %v1978 = vmul.f32 %v1823, %v1784
        %v1979 = vmul.f32 %v1978, 0.2
        %v1980 = vmul.f32 %v1977, %v1784
        %v1981 = vstv %s618
        %v1982 = vmul.f32 %v1980, %v1981
        %v1983 = vadd.f32 %v1979, %v1982
        %v1984 = vmul.f32 %v1983, %v797
        %v1985 = vsel %vm820, %v1984, 0.0
        %v1986 = vrot.slane %v1985, 4
        %v1987 = vadd.f32 %v1985, %v1986
        %v1988 = vrot.slane %v1987, 2
        %v1989 = vadd.f32 %v1987, %v1988
        %v1990 = vrot.slane %v1989, 1
        %v1991 = vadd.f32 %v1989, %v1990
        %v1993 = vsel %vm820, %v1991, 0
        %1995 = vmatprep.subr.mxu0 0.0
        %1996 = vmatpush1.msra.mxu0 0.0
        %1997 = vmatprep.subr.mxu0 0.0
        %1998 = vmatpush1.msra.mxu0 0.0
        %1999 = vmatprep.subr.mxu0 0.0
        %2000 = vmatpush1.msra.mxu0 0.0
        %2001 = vmatprep.subr.mxu0 0.0
        %2002 = vmatpush1.msra.mxu0 0.0
        %2003 = vmatprep.subr.mxu0 0.0
        %2004 = vmatpush1.msra.mxu0 0.0
        %2005 = vmatprep.subr.mxu0 0.0
        %2006 = vmatpush1.msra.mxu0 0.0
        %2007 = vmatprep.subr.mxu0 0.0
        %2008 = vmatpush1.msra.mxu0 0.0
        %2009 = vmatprep.subr.mxu0 0.0
        %2010 = vmatpush1.msra.mxu0 0.0
        %2011 = vmatprep.subr.mxu0 0.0
        %2012 = vmatpush1.msra.mxu0 0.0
        %2013 = vmatprep.subr.mxu0 0.0
        %2014 = vmatpush1.msra.mxu0 0.0
        %2015 = vmatprep.subr.mxu0 0.0
        %2016 = vmatpush1.msra.mxu0 0.0
        %2017 = vmatprep.subr.mxu0 0.0
        %2018 = vmatpush1.msra.mxu0 0.0
        %2019 = vmatprep.subr.mxu0 0.0
        %2020 = vmatpush1.msra.mxu0 0.0
        %2021 = vmatprep.subr.mxu0 0.0
        %2022 = vmatpush1.msra.mxu0 0.0
        %2023 = vmatprep.subr.mxu0 0.0
        %2024 = vmatpush1.msra.mxu0 %v1800
        %2025 = vmatprep.subr.mxu0 0.0
        %2026 = vmatpush1.msra.mxu0 %v1799
        %2027 = vmatprep.subr.mxu0 0.0
        %2028 = vmatpush2.msra.mxu0 0.0
        %2029 = vmatprep.subr.mxu0 0.0
        %2030 = vmatpush2.msra.mxu0 0.0
        %2031 = vmatprep.subr.mxu0 0.0
        %2032 = vmatpush2.msra.mxu0 0.0
        %2033 = vmatprep.subr.mxu0 0.0
        %2034 = vmatpush2.msra.mxu0 0.0
        %2035 = vmatprep.subr.mxu0 0.0
        %2036 = vmatpush2.msra.mxu0 0.0
        %2037 = vmatprep.subr.mxu0 0.0
        %2038 = vmatpush2.msra.mxu0 0.0
        %2039 = vmatprep.subr.mxu0 0.0
        %2040 = vmatpush2.msra.mxu0 0.0
        %2041 = vmatprep.subr.mxu0 0.0
        %2042 = vmatpush2.msra.mxu0 0.0
        %2043 = vmatprep.subr.mxu0 0.0
        %2044 = vmatpush2.msra.mxu0 0.0
        %2045 = vmatprep.subr.mxu0 0.0
        %2046 = vmatpush2.msra.mxu0 0.0
        %2047 = vmatprep.subr.mxu0 0.0
        %2048 = vmatpush2.msra.mxu0 0.0
        %2049 = vmatprep.subr.mxu0 0.0
        %2050 = vmatpush2.msra.mxu0 0.0
        %2051 = vmatprep.subr.mxu0 0.0
        %2052 = vmatpush2.msra.mxu0 0.0
        %2053 = vmatprep.subr.mxu0 0.0
        %2054 = vmatpush2.msra.mxu0 0.0
        %2055 = vmatprep.subr.mxu0 0.0
        %2056 = vmatpush2.msra.mxu0 0.0
        %2057 = vmatprep.subr.mxu0 0.0
        %2058 = vmatpush2.msra.mxu0 0.0
        %2059 = vmatprep.mubr.f32.mxu0 0.0
        %2060 = vmatmul.mubr.f32.gmra.mxu0 %v1993
        %v2061 = vpop.f32.mrf.mxu0
        %v2062 = vadd.f32 0.0, %v2061
        %v2063 = vpop.f32.mrf.mxu0
        %2064 = vdwg.mxu0
        %2065 = vst [vmem:[%s614] sm:$0x1] %v2062
        %p2066 = scmp.lt.s32.totalorder %s30, 1
        %s2067 = scalar_select %p2066, %s30, 1
        %s2068 = scalar_lea.vmem %s17, %s2067
        // Predicated region
        $region101: #{cross_sparse_aggr_forward.1} parent=87 // pred_check
          %p2069 = pneg %p420
        $region102: #{cross_sparse_aggr_forward.1} parent=87 // pred_check_branch
          %2071 = sbr.rel (%p2069) target = $region104
        $region103: #{cross_sparse_aggr_forward.1} parent=87 // pred_region
          _
        $region104: #{cross_sparse_aggr_forward.1} parent=87 // pred_fallthru
          _
      $region88: #{cross_sparse_aggr_forward.1} parent=5 // pred_fallthru
        _
      %p2072 = scmp.le.s32.totalorder 2, %s25
      // Predicated region
      $region105: #{cross_sparse_aggr_forward.1} parent=5 // pred_check
        %p2073 = pneg %p2072
      $region106: #{cross_sparse_aggr_forward.1} parent=5 // pred_check_branch
        %2075 = sbr.rel (%p2073) target = $region108
      $region107: #{cross_sparse_aggr_forward.1} parent=5 // pred_region
        %s2076 = ssub.s32 %s25, 2
        // Predicated region
        $region109: #{cross_sparse_aggr_forward.1} parent=107 // pred_check
          %p2077 = pneg %p426
        $region110: #{cross_sparse_aggr_forward.1} parent=107 // pred_check_branch
          %2079 = sbr.rel (%p2077) target = $region112
        $region111: #{cross_sparse_aggr_forward.1} parent=107 // pred_region
          %p2080 = scmp.lt.s32.totalorder %s31, 1
          %s2081 = scalar_select %p2080, %s31, 1
          %s2082 = scalar_lea.vmem %s17, %s2081
        $region112: #{cross_sparse_aggr_forward.1} parent=107 // pred_fallthru
          _
      $region108: #{cross_sparse_aggr_forward.1} parent=5 // pred_fallthru
        _
    $region6: #{cross_sparse_aggr_forward.1} parent=1 // loop_footer
      %s29 = sadd.s32 1, %s25
    $region7: #{cross_sparse_aggr_forward.1} parent=1 // loop_footer_branch
      %24 = sbr.rel target = $region3
    $region8: #{cross_sparse_aggr_forward.1} parent=1 // loop_exit
      _
    %2083 = vsyncpa [#allocation3], 1
    %s2084 = scalar_lea.sflag [#allocation3], 1
    %2085 = vsyncpa %s2084, 1
    %2086 = vsyncpa [#allocation5], 1

</llo_original>
